<compile_context>
chip_gen: v5e
topology: v5e:2x2
jax: 0.10.0
libtpu: 0.0.40
codegen_flags: <defaults>
</compile_context>

<pallas_src>
import functools

import numpy as np
import jax
import jax.numpy as jnp
from jax.experimental import pallas as pl
from jax.experimental.pallas import tpu as pltpu


# ----------------------------- config ---------------------------------------
SR = 22050
WIN_LENGTH = 1024
HOP_LENGTH = 256
N_FFT = 1024
F_MIN = 0.0
F_MAX = 8000.0
N_MELS = 80
POWER = 1.0                              # magnitude spectrogram
CLAMP_MIN = 1e-5
PAD = (N_FFT - HOP_LENGTH) // 2          # torchaudio: constant (zero) two-sided pad

N_FREQS = N_FFT // 2 + 1                 # 513
N_MELS_PAD = 128                         # pad 80 -> 128 (lane-dense output)
assert N_FFT % HOP_LENGTH == 0           # frame = 4 consecutive hop-blocks


# --------------------- librosa-style slaney mel filterbank -------------------
def _hz_to_mel(freqs):
    freqs = np.asarray(freqs, dtype=np.float64)
    f_sp = 200.0 / 3.0
    mels = freqs / f_sp
    min_log_hz = 1000.0
    min_log_mel = min_log_hz / f_sp
    logstep = np.log(6.4) / 27.0
    log_region = freqs >= min_log_hz
    mels = np.where(
        log_region,
        min_log_mel + np.log(np.maximum(freqs, 1e-10) / min_log_hz) / logstep,
        mels,
    )
    return mels


def _mel_to_hz(mels):
    mels = np.asarray(mels, dtype=np.float64)
    f_sp = 200.0 / 3.0
    freqs = f_sp * mels
    min_log_hz = 1000.0
    min_log_mel = min_log_hz / f_sp
    logstep = np.log(6.4) / 27.0
    log_region = mels >= min_log_mel
    freqs = np.where(log_region, min_log_hz * np.exp(logstep * (mels - min_log_mel)), freqs)
    return freqs


def make_mel_basis(sr, n_fft, n_mels, fmin, fmax):
    """Replicates librosa.filters.mel(htk=False, norm='slaney'); returns [n_freqs, n_mels]."""
    n_freqs = n_fft // 2 + 1
    fftfreqs = np.linspace(0.0, sr / 2.0, n_freqs, dtype=np.float64)
    mel_f = _mel_to_hz(np.linspace(_hz_to_mel(fmin), _hz_to_mel(fmax), n_mels + 2))
    fdiff = np.diff(mel_f)
    ramps = mel_f[:, None] - fftfreqs[None, :]
    weights = np.zeros((n_mels, n_freqs), dtype=np.float64)
    for i in range(n_mels):
        lower = -ramps[i] / fdiff[i]
        upper = ramps[i + 2] / fdiff[i + 1]
        weights[i] = np.maximum(0.0, np.minimum(lower, upper))
    enorm = 2.0 / (mel_f[2: n_mels + 2] - mel_f[:n_mels])     # slaney norm
    weights *= enorm[:, None]
    return weights.T.astype(np.float32)                       # [n_freqs, n_mels]


# Truncate the frequency axis to the filterbank's actual support (exact: rows of
# the fb above the highest nonzero bin are multiplied by exact zeros), rounded up
# to a multiple of 128 lanes.  For sr=22050/f_max=8000 this is 384 (vs 513 bins).
_FB_FULL_NP = make_mel_basis(SR, N_FFT, N_MELS, F_MIN, F_MAX)        # [N_FREQS, N_MELS]
_nz_rows = np.where(_FB_FULL_NP.max(axis=1) > 0.0)[0]
_N_FREQS_USED = int(_nz_rows[-1]) + 1 if _nz_rows.size else N_FREQS
N_FREQS_PAD = max(128, ((_N_FREQS_USED + 127) // 128) * 128)


# ------------------------- windowed DFT + mel constants -----------------------
@functools.lru_cache(maxsize=1)
def _dft_mel_constants():
    """Returns ([N_FFT, 2*N_FREQS_PAD] bf16 (win*cos | -win*sin), [N_FREQS_PAD, N_MELS_PAD] bf16)."""
    ncols = min(N_FREQS_PAD, N_FREQS)
    n = np.arange(N_FFT, dtype=np.float64)[:, None]                    # sample index
    k = np.arange(ncols, dtype=np.float64)[None, :]                    # frequency bin
    ang = 2.0 * np.pi * n * k / N_FFT
    window = 0.5 * (1.0 - np.cos(2.0 * np.pi * np.arange(N_FFT) / N_FFT))  # periodic hann
    cossin = np.zeros((N_FFT, 2 * N_FREQS_PAD), np.float32)
    cossin[:, :ncols] = window[:, None] * np.cos(ang)                  # real part
    cossin[:, N_FREQS_PAD:N_FREQS_PAD + ncols] = -window[:, None] * np.sin(ang)  # imag part
    fb = np.zeros((N_FREQS_PAD, N_MELS_PAD), np.float32)
    fb[:ncols, :N_MELS] = _FB_FULL_NP[:ncols]
    return (jnp.asarray(cossin, dtype=jnp.bfloat16),
            jnp.asarray(fb, dtype=jnp.bfloat16))


# ------------------------------ Pallas kernel --------------------------------
def mel_kernel(frames_ref, cossin_ref, fb_ref, out_ref):
    f = frames_ref[...]                                                   # (TM, N_FFT) bf16
    # single fused windowed-DFT matmul: re | im   (f32 accumulation on the MXU)
    ri = jnp.dot(f, cossin_ref[...], preferred_element_type=jnp.float32)  # (TM, 2*NF)
    re = ri[:, :N_FREQS_PAD]
    im = ri[:, N_FREQS_PAD:]
    mag = jnp.sqrt(re * re + im * im)                                     # power = 1.0, f32
    mel = jnp.dot(mag.astype(jnp.bfloat16), fb_ref[...],
                  preferred_element_type=jnp.float32)                     # (TM, N_MELS_PAD)
    out_ref[...] = jnp.log(jnp.maximum(mel, CLAMP_MIN))


# ------------------------------ glue / wrapper --------------------------------
def _frame_signal(audio):
    """[B, T] f32 -> ([B, n_frames, N_FFT] f32 frames, n_frames).  No gather:
    frames are built from N_FFT/HOP shifted slices of the hop-blocked signal."""
    B, T = audio.shape
    Tp = T + 2 * PAD
    n_frames = 1 + (Tp - N_FFT) // HOP_LENGTH
    R = N_FFT // HOP_LENGTH
    n_blocks = -(-Tp // HOP_LENGTH)                         # ceil
    pad_end = n_blocks * HOP_LENGTH - Tp
    x = jnp.pad(audio, ((0, 0), (PAD, PAD + pad_end)))      # constant (zero) pad
    blocks = x.reshape(B, n_blocks, HOP_LENGTH)
    frames = jnp.concatenate(
        [blocks[:, s:s + n_frames, :] for s in range(R)], axis=-1)
    return frames, n_frames


def _choose_tm(rows, tm_max=256, tm_min=16):
    """Largest row tile <= tm_max that keeps >= 2 grid steps (v7x has 2 TensorCores)."""
    tm = tm_max
    while tm > tm_min and rows <= tm:
        tm //= 2
    return tm


def mel_spectrogram(audio: jnp.ndarray) -> jnp.ndarray:
    """audio: [B, T] float32  ->  [B, n_mels, T_frames] float32 (log-mel)."""
    audio = audio.astype(jnp.float32)
    B, _ = audio.shape
    frames, n_frames = _frame_signal(audio)
    frames = frames.reshape(B * n_frames, N_FFT).astype(jnp.bfloat16)

    rows = B * n_frames
    tm = _choose_tm(rows)
    rows_pad = -(-rows // tm) * tm
    if rows_pad != rows:
        frames = jnp.pad(frames, ((0, rows_pad - rows), (0, 0)))

    cossin, fb = _dft_mel_constants()

    out = pl.pallas_call(
        mel_kernel,
        out_shape=jax.ShapeDtypeStruct((rows_pad, N_MELS_PAD), jnp.float32),
        grid_spec=pltpu.PrefetchScalarGridSpec(
            num_scalar_prefetch=0,
            grid=(rows_pad // tm,),
            in_specs=[
                pl.BlockSpec((tm, N_FFT), lambda i: (i, 0)),
                pl.BlockSpec((N_FFT, 2 * N_FREQS_PAD), lambda i: (0, 0)),
                pl.BlockSpec((N_FREQS_PAD, N_MELS_PAD), lambda i: (0, 0)),
            ],
            out_specs=pl.BlockSpec((tm, N_MELS_PAD), lambda i: (i, 0)),
        ),
        compiler_params=pltpu.CompilerParams(
            dimension_semantics=("parallel",),
        ),
    )(frames, cossin, fb)

    mel = out[:rows, :N_MELS].reshape(B, n_frames, N_MELS)   # [B, T', n_mels]
    return jnp.transpose(mel, (0, 2, 1))                     # [B, n_mels, T']


# ------------------------ pure-JAX f32 reference (test only) ------------------
def mel_reference(audio):
    """Same math in f32 with the full 513-bin filterbank (validates the bf16 +
    truncation choices in the Pallas kernel)."""
    frames, _ = _frame_signal(audio.astype(jnp.float32))     # [B, T', N_FFT] f32
    n = np.arange(N_FFT, dtype=np.float64)[:, None]
    k = np.arange(N_FREQS, dtype=np.float64)[None, :]
    ang = 2.0 * np.pi * n * k / N_FFT
    window = 0.5 * (1.0 - np.cos(2.0 * np.pi * np.arange(N_FFT) / N_FFT))
    cos_m = jnp.asarray((window[:, None] * np.cos(ang)).astype(np.float32))
    sin_m = jnp.asarray((-window[:, None] * np.sin(ang)).astype(np.float32))
    hi = jax.lax.Precision.HIGHEST
    re = jnp.einsum("bts,sk->btk", frames, cos_m, precision=hi)
    im = jnp.einsum("bts,sk->btk", frames, sin_m, precision=hi)
    mag = jnp.sqrt(re * re + im * im)
    mel = jnp.einsum("btk,km->btm", mag, jnp.asarray(_FB_FULL_NP), precision=hi)
    mel = jnp.log(jnp.maximum(mel, CLAMP_MIN))
    return jnp.transpose(mel, (0, 2, 1))


# --------------------------------- main ---------------------------------------
if __name__ == "__main__":
    key = jax.random.PRNGKey(0)
    B, T = 2, 4096                                           # small audio clip
    audio = jax.random.normal(key, (B, T), dtype=jnp.float32) * 0.1

    mel = mel_spectrogram(audio)
    jax.block_until_ready(mel)

    expected_frames = 1 + (T + 2 * PAD - N_FFT) // HOP_LENGTH
    assert mel.shape == (B, N_MELS, expected_frames), mel.shape
    assert bool(jnp.all(jnp.isfinite(mel)))

    # bf16 MXU operands -> small error before the log; check against f32 reference.
    ref = mel_reference(audio)
    max_err = float(jnp.max(jnp.abs(mel - ref)))
    assert max_err < 0.25, f"log-mel max abs error too large: {max_err}"

    print("KERNEL_OK")
</pallas_src>

<mosaic_0001>
module attributes {stable_mosaic.version = 11 : i64} {
  func.func @mel_kernel(%arg0: i32, %arg1: memref<16x1024xbf16, #tpu.memory_space<vmem>>, %arg2: memref<1024x768xbf16, #tpu.memory_space<vmem>>, %arg3: memref<384x128xbf16, #tpu.memory_space<vmem>>, %arg4: memref<16x128xf32, #tpu.memory_space<vmem>>) attributes {dimension_semantics = [#tpu.dimension_semantics<parallel>], iteration_bounds = array<i64: 2>, scalar_prefetch = 0 : i64, scratch_operands = 0 : i64, tpu.core_type = #tpu.core_type<tc>, window_params = [{transform_indices = @transform_0, window_bounds = array<i64: 16, 1024>}, {pipeline_mode = #tpu.pipeline_mode<synchronous>, transform_indices = @transform_1, window_bounds = array<i64: 1024, 768>}, {pipeline_mode = #tpu.pipeline_mode<synchronous>, transform_indices = @transform_2, window_bounds = array<i64: 384, 128>}, {transform_indices = @transform_3, window_bounds = array<i64: 16, 128>}]} {
    %c0 = arith.constant 0 : index
    %c0_0 = arith.constant 0 : index
    %0 = vector.load %arg1[%c0, %c0_0] : memref<16x1024xbf16, #tpu.memory_space<vmem>>, vector<16x1024xbf16>
    %c0_1 = arith.constant 0 : index
    %c0_2 = arith.constant 0 : index
    %1 = vector.load %arg2[%c0_1, %c0_2] : memref<1024x768xbf16, #tpu.memory_space<vmem>>, vector<1024x768xbf16>
    %cst = arith.constant dense<0.000000e+00> : vector<16x768xf32>
    %2 = tpu.matmul %0, %1, %cst {dimension_numbers = #tpu.dot_dimension_numbers<[1], [0], [0], [1], [0, 0, 1, 1], [], []>} : vector<16x1024xbf16>, vector<1024x768xbf16>, vector<16x768xf32> -> vector<16x768xf32>
    %3 = vector.extract_strided_slice %2 {offsets = [0, 0], sizes = [16, 384], strides = [1, 1]} : vector<16x768xf32> to vector<16x384xf32>
    %4 = vector.extract_strided_slice %2 {offsets = [0, 384], sizes = [16, 384], strides = [1, 1]} : vector<16x768xf32> to vector<16x384xf32>
    %5 = arith.mulf %3, %3 : vector<16x384xf32>
    %6 = arith.mulf %4, %4 : vector<16x384xf32>
    %7 = arith.addf %5, %6 : vector<16x384xf32>
    %8 = math.sqrt %7 : vector<16x384xf32>
    %9 = arith.truncf %8 : vector<16x384xf32> to vector<16x384xbf16>
    %c0_3 = arith.constant 0 : index
    %c0_4 = arith.constant 0 : index
    %10 = vector.load %arg3[%c0_3, %c0_4] : memref<384x128xbf16, #tpu.memory_space<vmem>>, vector<384x128xbf16>
    %cst_5 = arith.constant dense<0.000000e+00> : vector<16x128xf32>
    %11 = tpu.matmul %9, %10, %cst_5 {dimension_numbers = #tpu.dot_dimension_numbers<[1], [0], [0], [1], [0, 0, 1, 1], [], []>} : vector<16x384xbf16>, vector<384x128xbf16>, vector<16x128xf32> -> vector<16x128xf32>
    %cst_6 = arith.constant 9.99999974E-6 : f32
    %12 = vector.broadcast %cst_6 : f32 to vector<16x128xf32>
    %13 = arith.maximumf %11, %12 : vector<16x128xf32>
    %14 = math.log %13 : vector<16x128xf32>
    %c0_7 = arith.constant 0 : index
    %c0_8 = arith.constant 0 : index
    %15 = vector.load %arg4[%c0_7, %c0_8] : memref<16x128xf32, #tpu.memory_space<vmem>>, vector<16x128xf32>
    tpu.vector_store %arg4[%c0_7, %c0_8], %14 {strides = array<i32>} : memref<16x128xf32, #tpu.memory_space<vmem>>, vector<16x128xf32>,
    return
  }
  func.func @transform_0(%arg0: i32) -> (i32, i32) {
    %c0_i32 = arith.constant 0 : i32
    %c0_i32_0 = arith.constant 0 : i32
    return %arg0, %c0_i32 : i32, i32
  }
  func.func @transform_1(%arg0: i32) -> (i32, i32) {
    %c0_i32 = arith.constant 0 : i32
    %c0_i32_0 = arith.constant 0 : i32
    %c0_i32_1 = arith.constant 0 : i32
    return %c0_i32, %c0_i32_0 : i32, i32
  }
  func.func @transform_2(%arg0: i32) -> (i32, i32) {
    %c0_i32 = arith.constant 0 : i32
    %c0_i32_0 = arith.constant 0 : i32
    %c0_i32_1 = arith.constant 0 : i32
    return %c0_i32, %c0_i32_0 : i32, i32
  }
  func.func @transform_3(%arg0: i32) -> (i32, i32) {
    %c0_i32 = arith.constant 0 : i32
    %c0_i32_0 = arith.constant 0 : i32
    return %arg0, %c0_i32 : i32, i32
  }
}

</mosaic_0001>

<llo_original>
// kernel: tpu_custom_call.1
$region0: #{tpu_custom_call.1}
  #allocation0 [shape = 'u32[]', space=smem, size = 0x4, offset = 0x4, fixed_abs, tag = 'smem constant byte address 0x4 - core index']
  #allocation1 [shape = 'u32[72,128]{1,0:T(1,128)}', space=vmem, size = 0x9000, scoped, tag = 'internal scratch']
  %s0 = inlined_call_operand.hbm [shape: bf16[32,1024], index: 0, kind: input, shape index: {}]
  %s1 = inlined_call_operand.hbm [shape: bf16[1024,768], index: 1, kind: input, shape index: {}]
  %s2 = inlined_call_operand.hbm [shape: bf16[384,128], index: 2, kind: input, shape index: {}]
  %s3 = inlined_call_operand.hbm [shape: f32[32,128], index: 3, kind: output, shape index: {}]
  %s4 = sld [smem:[#allocation0]]
  $region57: #{tpu_custom_call.1} parent=0
    _
  %s6 = ssub.s32 1, %s4
  %s7 = scalar_select 0, %s6, %s4
  $region1: #{tpu_custom_call.1} parent=0
    #allocation2 [shape = 'u8[65536]{0}', space=vmem, size = 0x10000, scoped, tag = 'input window, operand 0']
    #allocation3 [shape = 's32[2]{0}', space=sflag, size = 0x8, scoped, tag = 'scoped memory for tpu_custom_call.1']
    #allocation4 [shape = 's32[2]{0}', space=sflag, size = 0x8, scoped, tag = 'scoped memory for tpu_custom_call.1']
    #allocation5 [shape = 'u8[1572864]{0}', space=vmem, size = 0x180000, scoped, tag = 'input window, operand 1, single buffered']
    #allocation6 [shape = 's32[1]{0}', space=sflag, size = 0x4, scoped, tag = 'scoped memory for tpu_custom_call.1']
    #allocation7 [shape = 'u8[98304]{0}', space=vmem, size = 0x18000, scoped, tag = 'input window, operand 2, single buffered']
    #allocation8 [shape = 'u8[16384]{0}', space=vmem, size = 0x4000, scoped, tag = 'output window, operand 0']
    %8 = vsyncpa [#allocation3], 0
    %s9 = scalar_lea.sflag [#allocation3], 1
    %10 = vsyncpa %s9, 0
    %11 = vsyncpa [#allocation6], 0
    %12 = vsyncpa [#allocation4], 0
    %s13 = scalar_lea.sflag [#allocation4], 1
    %14 = vsyncpa %s13, 0
    loop: start=0, step=1, limit=4
    $region2: #{tpu_custom_call.1} parent=1 // loop_pre_header
      _
    $region3: #{tpu_custom_call.1} parent=1 // loop_header
      %s16 = sphi 0, %s20
      %p17 = scmp.ge.s32.totalorder %s16, 4
      %s26 = sphi 0, %s28
      %s29 = sphi 0, %s26
      %s30 = sphi 0, %s29
      %s46 = sphi 0, %s30
      %s50 = sphi 0, %s50
      %s52 = sphi 0, %s50
      %s53 = sphi 0, %s52
      %s67 = sphi 0, %s53
      %s71 = sphi 0, %s71
      %s73 = sphi 0, %s71
      %s74 = sphi 0, %s73
      %s88 = sphi 0, %s74
      %s94 = sphi 0, %s96
      %s97 = sphi 0, %s94
      %s98 = sphi 0, %s97
      %s114 = sphi 0, %s98
    $region4: #{tpu_custom_call.1} parent=1 // loop_header_branch
      %19 = sbr.rel (%p17) target = $region8
    $region5: #{tpu_custom_call.1} parent=1 // loop_body
      %s21 = ssub.s32 %s16, 1
      %s22 = ssub.s32 %s16, 2
      %s23 = sadd.s32 %s16, 1
      %s24 = ssub.s32 %s16, %s23
      %p25 = scmp.eq.s32.totalorder %s24, 0
      %s27 = sadd.s32 %s26, 1
      %s28 = scalar_select %p25, %s26, %s27
      %p31 = pneg %p25
      %p32 = scmp.eq.s32.totalorder %s16, 1
      %p33 = por %p31, %p32
      %p34 = scmp.ne.s32.totalorder %s26, %s29
      %p35 = scmp.eq.s32.totalorder %s16, 0
      %p36 = por %p34, %p35
      %p37 = scmp.ne.s32.totalorder %s26, %s29
      %p38 = scmp.eq.s32.totalorder %s21, 1
      %p39 = por %p37, %p38
      %p40 = scmp.ne.s32.totalorder %s29, %s30
      %p41 = scmp.eq.s32.totalorder %s21, 0
      %p42 = por %p40, %p41
      %p43 = scmp.ne.s32.totalorder %s29, %s30
      %p44 = scmp.eq.s32.totalorder %s22, 1
      %p45 = por %p43, %p44
      %p47 = scmp.ne.s32.totalorder %s30, %s46
      %p48 = scmp.eq.s32.totalorder %s22, 0
      %p49 = por %p47, %p48
      %s51 = sadd.s32 %s50, 1
      %p54 = scmp.eq.s32.totalorder %s16, 1
      %p55 = scmp.ne.s32.totalorder %s50, %s52
      %p56 = scmp.eq.s32.totalorder %s16, 0
      %p57 = por %p55, %p56
      %p58 = scmp.ne.s32.totalorder %s50, %s52
      %p59 = scmp.eq.s32.totalorder %s21, 1
      %p60 = por %p58, %p59
      %p61 = scmp.ne.s32.totalorder %s52, %s53
      %p62 = scmp.eq.s32.totalorder %s21, 0
      %p63 = por %p61, %p62
      %p64 = scmp.ne.s32.totalorder %s52, %s53
      %p65 = scmp.eq.s32.totalorder %s22, 1
      %p66 = por %p64, %p65
      %p68 = scmp.ne.s32.totalorder %s53, %s67
      %p69 = scmp.eq.s32.totalorder %s22, 0
      %p70 = por %p68, %p69
      %s72 = sadd.s32 %s71, 1
      %p75 = scmp.eq.s32.totalorder %s16, 1
      %p76 = scmp.ne.s32.totalorder %s71, %s73
      %p77 = scmp.eq.s32.totalorder %s16, 0
      %p78 = por %p76, %p77
      %p79 = scmp.ne.s32.totalorder %s71, %s73
      %p80 = scmp.eq.s32.totalorder %s21, 1
      %p81 = por %p79, %p80
      %p82 = scmp.ne.s32.totalorder %s73, %s74
      %p83 = scmp.eq.s32.totalorder %s21, 0
      %p84 = por %p82, %p83
      %p85 = scmp.ne.s32.totalorder %s73, %s74
      %p86 = scmp.eq.s32.totalorder %s22, 1
      %p87 = por %p85, %p86
      %p89 = scmp.ne.s32.totalorder %s74, %s88
      %p90 = scmp.eq.s32.totalorder %s22, 0
      %p91 = por %p89, %p90
      %s92 = ssub.s32 %s16, %s23
      %p93 = scmp.eq.s32.totalorder %s92, 0
      %s95 = sadd.s32 %s94, 1
      %s96 = scalar_select %p93, %s94, %s95
      %p99 = pneg %p93
      %p100 = scmp.eq.s32.totalorder %s16, 1
      %p101 = por %p99, %p100
      %p102 = scmp.ne.s32.totalorder %s94, %s97
      %p103 = scmp.eq.s32.totalorder %s16, 0
      %p104 = por %p102, %p103
      %p105 = scmp.ne.s32.totalorder %s94, %s97
      %p106 = scmp.eq.s32.totalorder %s21, 1
      %p107 = por %p105, %p106
      %p108 = scmp.ne.s32.totalorder %s97, %s98
      %p109 = scmp.eq.s32.totalorder %s21, 0
      %p110 = por %p108, %p109
      %p111 = scmp.ne.s32.totalorder %s97, %s98
      %p112 = scmp.eq.s32.totalorder %s22, 1
      %p113 = por %p111, %p112
      %p115 = scmp.ne.s32.totalorder %s98, %s114
      %p116 = scmp.eq.s32.totalorder %s22, 0
      %p117 = por %p115, %p116
      %p118 = scmp.le.s32.totalorder 1, %s16
      %p119 = scmp.lt.s32.totalorder %s16, 3
      %p120 = pnand %p118, %p119
      %p121 = pneg %p120
      // Predicated region
      $region9: #{tpu_custom_call.1} parent=5 // pred_check
        _
      $region10: #{tpu_custom_call.1} parent=5 // pred_check_branch
        %123 = sbr.rel (%p120) target = $region12
      $region11: #{tpu_custom_call.1} parent=5 // pred_region
        %s124 = ssub.s32 %s16, 1
        // Predicated region
        $region13: #{tpu_custom_call.1} parent=11 // pred_check
          %p125 = pneg %p63
        $region14: #{tpu_custom_call.1} parent=11 // pred_check_branch
          %127 = sbr.rel (%p125) target = $region16
        $region15: #{tpu_custom_call.1} parent=11 // pred_region
          %129 = vsyncadd [#allocation6], 0
          %s130 = sshll.u32 %s1, 4
          %s131 = int_to_ptr.hbm [resolvable:$true] %s130
          %s132 = sshll.u32 [#allocation5], 4
          %s133 = int_to_ptr.vmem [resolvable:$true] %s132
          %138 = dma.hbm_to_vmem [thread:$0]  %s131, 49152, %s133, [#allocation6], 384, 384, 24
        $region16: #{tpu_custom_call.1} parent=11 // pred_fallthru
          _
        // Predicated region
        $region17: #{tpu_custom_call.1} parent=11 // pred_check
          %p139 = pneg %p84
        $region18: #{tpu_custom_call.1} parent=11 // pred_check_branch
          %141 = sbr.rel (%p139) target = $region20
        $region19: #{tpu_custom_call.1} parent=11 // pred_region
          %143 = vsyncadd [#allocation6], 0
          %s144 = sshll.u32 %s2, 4
          %s145 = int_to_ptr.hbm [resolvable:$true] %s144
          %s146 = sshll.u32 [#allocation7], 4
          %s147 = int_to_ptr.vmem [resolvable:$true] %s146
          %152 = dma.hbm_to_vmem [thread:$0]  %s145, 3072, %s147, [#allocation6], 64, 64, 4
        $region20: #{tpu_custom_call.1} parent=11 // pred_fallthru
          _
      $region12: #{tpu_custom_call.1} parent=5 // pred_fallthru
        _
      %p153 = scmp.lt.s32.totalorder %s16, 2
      // Predicated region
      $region21: #{tpu_custom_call.1} parent=5 // pred_check
        %p154 = pneg %p153
      $region22: #{tpu_custom_call.1} parent=5 // pred_check_branch
        %156 = sbr.rel (%p154) target = $region24
      $region23: #{tpu_custom_call.1} parent=5 // pred_region
        // Predicated region
        $region25: #{tpu_custom_call.1} parent=23 // pred_check
          %p157 = pneg %p36
        $region26: #{tpu_custom_call.1} parent=23 // pred_check_branch
          %159 = sbr.rel (%p157) target = $region28
        $region27: #{tpu_custom_call.1} parent=23 // pred_region
          %s160 = sand.u32 %s26, 1
          %s161 = scalar_lea.sflag [#allocation3], %s160
          %s162 = sand.u32 %s26, 1
          %s163 = smul.addr %s162, 64
          %s164 = scalar_lea.vmem [#allocation2], %s163
          %s165 = smul.u32 2, %s16
          %167 = vsyncadd %s161, 0
          %s168 = smul.addr %s165, 8
          %s169 = smul.addr %s168, 4
          %s170 = scalar_lea.hbm %s0, %s169
          %s171 = sshll.u32 %s170, 4
          %s172 = int_to_ptr.hbm [resolvable:$true] %s171
          %s173 = sshll.u32 %s164, 4
          %s174 = int_to_ptr.vmem [resolvable:$true] %s173
          %179 = dma.hbm_to_vmem [thread:$0]  %s172, 1024, %s174, %s161, 512, 512, 32
        $region28: #{tpu_custom_call.1} parent=23 // pred_fallthru
          _
      $region24: #{tpu_custom_call.1} parent=5 // pred_fallthru
        _
      %p180 = scmp.le.s32.totalorder 1, %s16
      %p181 = scmp.lt.s32.totalorder %s16, 3
      %p182 = pnand %p180, %p181
      %p183 = pneg %p182
      // Predicated region
      $region29: #{tpu_custom_call.1} parent=5 // pred_check
        _
      $region30: #{tpu_custom_call.1} parent=5 // pred_check_branch
        %185 = sbr.rel (%p182) target = $region32
      $region31: #{tpu_custom_call.1} parent=5 // pred_region
        %s186 = ssub.s32 %s16, 1
        %s187 = sand.u32 %s29, 1
        %s188 = scalar_lea.sflag [#allocation3], %s187
        %s189 = sand.u32 %s29, 1
        %s190 = smul.addr %s189, 64
        %s191 = scalar_lea.vmem [#allocation2], %s190
        // Predicated region
        $region33: #{tpu_custom_call.1} parent=31 // pred_check
          %p192 = pneg %p42
        $region34: #{tpu_custom_call.1} parent=31 // pred_check_branch
          %194 = sbr.rel (%p192) target = $region36
        $region35: #{tpu_custom_call.1} parent=31 // pred_region
          %196 = dma.done %s188, 1024
        $region36: #{tpu_custom_call.1} parent=31 // pred_fallthru
          _
        // Predicated region
        $region37: #{tpu_custom_call.1} parent=31 // pred_check
          %p197 = pneg %p63
        $region38: #{tpu_custom_call.1} parent=31 // pred_check_branch
          %199 = sbr.rel (%p197) target = $region40
        $region39: #{tpu_custom_call.1} parent=31 // pred_region
          %201 = dma.done [#allocation6], 49152
        $region40: #{tpu_custom_call.1} parent=31 // pred_fallthru
          _
        // Predicated region
        $region41: #{tpu_custom_call.1} parent=31 // pred_check
          %p202 = pneg %p84
        $region42: #{tpu_custom_call.1} parent=31 // pred_check_branch
          %204 = sbr.rel (%p202) target = $region44
        $region43: #{tpu_custom_call.1} parent=31 // pred_region
          %206 = dma.done [#allocation6], 3072
        $region44: #{tpu_custom_call.1} parent=31 // pred_fallthru
          _
        %s207 = sand.u32 %s29, 1
        %s208 = scalar_lea.sflag [#allocation3], %s207
        %s209 = sand.u32 %s29, 1
        %s210 = smul.addr %s209, 64
        %s211 = scalar_lea.vmem [#allocation2], %s210
        %p212 = pneg %p42
        %p213 = pneg %p39
        %p214 = pneg %p63
        %p215 = pneg %p60
        %p216 = pneg %p84
        %p217 = pneg %p81
        %p218 = pneg %p110
        %p219 = pneg %p107
        %s220 = sand.u32 %s97, 1
        %s221 = scalar_lea.sflag [#allocation4], %s220
        %s222 = sand.u32 %s97, 1
        %s223 = smul.addr %s222, 16
        %s224 = scalar_lea.vmem [#allocation8], %s223
        %s225 = smul.u32 2, %s21
        %s226 = smul.u32 2, %s21
        %v227 = vld [vmem:[%s191] sm:$0xff]
        %v228 = vld [vmem:[%s191 + $0x8] sm:$0xff]
        %v229 = vld [vmem:[%s191 + $0x10] sm:$0xff]
        %v230 = vld [vmem:[%s191 + $0x18] sm:$0xff]
        %v231 = vld [vmem:[%s191 + $0x20] sm:$0xff]
        %v232 = vld [vmem:[%s191 + $0x28] sm:$0xff]
        %v233 = vld [vmem:[%s191 + $0x30] sm:$0xff]
        %v234 = vld [vmem:[%s191 + $0x38] sm:$0xff]
        %v235 = vld [vmem:[#allocation5] sm:$0xff]
        %v236 = vld [vmem:[#allocation5 + $0x8] sm:$0xff]
        %v237 = vld [vmem:[#allocation5 + $0x10] sm:$0xff]
        %v238 = vld [vmem:[#allocation5 + $0x18] sm:$0xff]
        %v239 = vld [vmem:[#allocation5 + $0x20] sm:$0xff]
        %v240 = vld [vmem:[#allocation5 + $0x28] sm:$0xff]
        %v241 = vld [vmem:[#allocation5 + $0x30] sm:$0xff]
        %v242 = vld [vmem:[#allocation5 + $0x38] sm:$0xff]
        %v243 = vld [vmem:[#allocation5 + $0x40] sm:$0xff]
        %v244 = vld [vmem:[#allocation5 + $0x48] sm:$0xff]
        %v245 = vld [vmem:[#allocation5 + $0x50] sm:$0xff]
        %v246 = vld [vmem:[#allocation5 + $0x58] sm:$0xff]
        %v247 = vld [vmem:[#allocation5 + $0x60] sm:$0xff]
        %v248 = vld [vmem:[#allocation5 + $0x68] sm:$0xff]
        %v249 = vld [vmem:[#allocation5 + $0x70] sm:$0xff]
        %v250 = vld [vmem:[#allocation5 + $0x78] sm:$0xff]
        %v251 = vld [vmem:[#allocation5 + $0x80] sm:$0xff]
        %v252 = vld [vmem:[#allocation5 + $0x88] sm:$0xff]
        %v253 = vld [vmem:[#allocation5 + $0x90] sm:$0xff]
        %v254 = vld [vmem:[#allocation5 + $0x98] sm:$0xff]
        %v255 = vld [vmem:[#allocation5 + $0xa0] sm:$0xff]
        %v256 = vld [vmem:[#allocation5 + $0xa8] sm:$0xff]
        %v257 = vld [vmem:[#allocation5 + $0xb0] sm:$0xff]
        %v258 = vld [vmem:[#allocation5 + $0xb8] sm:$0xff]
        %v259 = vld [vmem:[#allocation5 + $0xc0] sm:$0xff]
        %v260 = vld [vmem:[#allocation5 + $0xc8] sm:$0xff]
        %v261 = vld [vmem:[#allocation5 + $0xd0] sm:$0xff]
        %v262 = vld [vmem:[#allocation5 + $0xd8] sm:$0xff]
        %v263 = vld [vmem:[#allocation5 + $0xe0] sm:$0xff]
        %v264 = vld [vmem:[#allocation5 + $0xe8] sm:$0xff]
        %v265 = vld [vmem:[#allocation5 + $0xf0] sm:$0xff]
        %v266 = vld [vmem:[#allocation5 + $0xf8] sm:$0xff]
        %v267 = vld [vmem:[#allocation5 + $0x100] sm:$0xff]
        %v268 = vld [vmem:[#allocation5 + $0x108] sm:$0xff]
        %v269 = vld [vmem:[#allocation5 + $0x110] sm:$0xff]
        %v270 = vld [vmem:[#allocation5 + $0x118] sm:$0xff]
        %v271 = vld [vmem:[#allocation5 + $0x120] sm:$0xff]
        %v272 = vld [vmem:[#allocation5 + $0x128] sm:$0xff]
        %v273 = vld [vmem:[#allocation5 + $0x130] sm:$0xff]
        %v274 = vld [vmem:[#allocation5 + $0x138] sm:$0xff]
        %v275 = vld [vmem:[#allocation5 + $0x140] sm:$0xff]
        %v276 = vld [vmem:[#allocation5 + $0x148] sm:$0xff]
        %v277 = vld [vmem:[#allocation5 + $0x150] sm:$0xff]
        %v278 = vld [vmem:[#allocation5 + $0x158] sm:$0xff]
        %v279 = vld [vmem:[#allocation5 + $0x160] sm:$0xff]
        %v280 = vld [vmem:[#allocation5 + $0x168] sm:$0xff]
        %v281 = vld [vmem:[#allocation5 + $0x170] sm:$0xff]
        %v282 = vld [vmem:[#allocation5 + $0x178] sm:$0xff]
        %v283 = vld [vmem:[#allocation5 + $0x180] sm:$0xff]
        %v284 = vld [vmem:[#allocation5 + $0x188] sm:$0xff]
        %v285 = vld [vmem:[#allocation5 + $0x190] sm:$0xff]
        %v286 = vld [vmem:[#allocation5 + $0x198] sm:$0xff]
        %v287 = vld [vmem:[#allocation5 + $0x1a0] sm:$0xff]
        %v288 = vld [vmem:[#allocation5 + $0x1a8] sm:$0xff]
        %v289 = vld [vmem:[#allocation5 + $0x1b0] sm:$0xff]
        %v290 = vld [vmem:[#allocation5 + $0x1b8] sm:$0xff]
        %v291 = vld [vmem:[#allocation5 + $0x1c0] sm:$0xff]
        %v292 = vld [vmem:[#allocation5 + $0x1c8] sm:$0xff]
        %v293 = vld [vmem:[#allocation5 + $0x1d0] sm:$0xff]
        %v294 = vld [vmem:[#allocation5 + $0x1d8] sm:$0xff]
        %v295 = vld [vmem:[#allocation5 + $0x1e0] sm:$0xff]
        %v296 = vld [vmem:[#allocation5 + $0x1e8] sm:$0xff]
        %v297 = vld [vmem:[#allocation5 + $0x1f0] sm:$0xff]
        %v298 = vld [vmem:[#allocation5 + $0x1f8] sm:$0xff]
        %v299 = vld [vmem:[#allocation5 + $0x200] sm:$0xff]
        %v300 = vld [vmem:[#allocation5 + $0x208] sm:$0xff]
        %v301 = vld [vmem:[#allocation5 + $0x210] sm:$0xff]
        %v302 = vld [vmem:[#allocation5 + $0x218] sm:$0xff]
        %v303 = vld [vmem:[#allocation5 + $0x220] sm:$0xff]
        %v304 = vld [vmem:[#allocation5 + $0x228] sm:$0xff]
        %v305 = vld [vmem:[#allocation5 + $0x230] sm:$0xff]
        %v306 = vld [vmem:[#allocation5 + $0x238] sm:$0xff]
        %v307 = vld [vmem:[#allocation5 + $0x240] sm:$0xff]
        %v308 = vld [vmem:[#allocation5 + $0x248] sm:$0xff]
        %v309 = vld [vmem:[#allocation5 + $0x250] sm:$0xff]
        %v310 = vld [vmem:[#allocation5 + $0x258] sm:$0xff]
        %v311 = vld [vmem:[#allocation5 + $0x260] sm:$0xff]
        %v312 = vld [vmem:[#allocation5 + $0x268] sm:$0xff]
        %v313 = vld [vmem:[#allocation5 + $0x270] sm:$0xff]
        %v314 = vld [vmem:[#allocation5 + $0x278] sm:$0xff]
        %v315 = vld [vmem:[#allocation5 + $0x280] sm:$0xff]
        %v316 = vld [vmem:[#allocation5 + $0x288] sm:$0xff]
        %v317 = vld [vmem:[#allocation5 + $0x290] sm:$0xff]
        %v318 = vld [vmem:[#allocation5 + $0x298] sm:$0xff]
        %v319 = vld [vmem:[#allocation5 + $0x2a0] sm:$0xff]
        %v320 = vld [vmem:[#allocation5 + $0x2a8] sm:$0xff]
        %v321 = vld [vmem:[#allocation5 + $0x2b0] sm:$0xff]
        %v322 = vld [vmem:[#allocation5 + $0x2b8] sm:$0xff]
        %v323 = vld [vmem:[#allocation5 + $0x2c0] sm:$0xff]
        %v324 = vld [vmem:[#allocation5 + $0x2c8] sm:$0xff]
        %v325 = vld [vmem:[#allocation5 + $0x2d0] sm:$0xff]
        %v326 = vld [vmem:[#allocation5 + $0x2d8] sm:$0xff]
        %v327 = vld [vmem:[#allocation5 + $0x2e0] sm:$0xff]
        %v328 = vld [vmem:[#allocation5 + $0x2e8] sm:$0xff]
        %v329 = vld [vmem:[#allocation5 + $0x2f0] sm:$0xff]
        %v330 = vld [vmem:[#allocation5 + $0x2f8] sm:$0xff]
        %v331 = vld [vmem:[#allocation5 + $0x300] sm:$0xff]
        %v332 = vld [vmem:[#allocation5 + $0x308] sm:$0xff]
        %v333 = vld [vmem:[#allocation5 + $0x310] sm:$0xff]
        %v334 = vld [vmem:[#allocation5 + $0x318] sm:$0xff]
        %v335 = vld [vmem:[#allocation5 + $0x320] sm:$0xff]
        %v336 = vld [vmem:[#allocation5 + $0x328] sm:$0xff]
        %v337 = vld [vmem:[#allocation5 + $0x330] sm:$0xff]
        %v338 = vld [vmem:[#allocation5 + $0x338] sm:$0xff]
        %v339 = vld [vmem:[#allocation5 + $0x340] sm:$0xff]
        %v340 = vld [vmem:[#allocation5 + $0x348] sm:$0xff]
        %v341 = vld [vmem:[#allocation5 + $0x350] sm:$0xff]
        %v342 = vld [vmem:[#allocation5 + $0x358] sm:$0xff]
        %v343 = vld [vmem:[#allocation5 + $0x360] sm:$0xff]
        %v344 = vld [vmem:[#allocation5 + $0x368] sm:$0xff]
        %v345 = vld [vmem:[#allocation5 + $0x370] sm:$0xff]
        %v346 = vld [vmem:[#allocation5 + $0x378] sm:$0xff]
        %v347 = vld [vmem:[#allocation5 + $0x380] sm:$0xff]
        %v348 = vld [vmem:[#allocation5 + $0x388] sm:$0xff]
        %v349 = vld [vmem:[#allocation5 + $0x390] sm:$0xff]
        %v350 = vld [vmem:[#allocation5 + $0x398] sm:$0xff]
        %v351 = vld [vmem:[#allocation5 + $0x3a0] sm:$0xff]
        %v352 = vld [vmem:[#allocation5 + $0x3a8] sm:$0xff]
        %v353 = vld [vmem:[#allocation5 + $0x3b0] sm:$0xff]
        %v354 = vld [vmem:[#allocation5 + $0x3b8] sm:$0xff]
        %v355 = vld [vmem:[#allocation5 + $0x3c0] sm:$0xff]
        %v356 = vld [vmem:[#allocation5 + $0x3c8] sm:$0xff]
        %v357 = vld [vmem:[#allocation5 + $0x3d0] sm:$0xff]
        %v358 = vld [vmem:[#allocation5 + $0x3d8] sm:$0xff]
        %v359 = vld [vmem:[#allocation5 + $0x3e0] sm:$0xff]
        %v360 = vld [vmem:[#allocation5 + $0x3e8] sm:$0xff]
        %v361 = vld [vmem:[#allocation5 + $0x3f0] sm:$0xff]
        %v362 = vld [vmem:[#allocation5 + $0x3f8] sm:$0xff]
        %v363 = vld [vmem:[#allocation5 + $0x400] sm:$0xff]
        %v364 = vld [vmem:[#allocation5 + $0x408] sm:$0xff]
        %v365 = vld [vmem:[#allocation5 + $0x410] sm:$0xff]
        %v366 = vld [vmem:[#allocation5 + $0x418] sm:$0xff]
        %v367 = vld [vmem:[#allocation5 + $0x420] sm:$0xff]
        %v368 = vld [vmem:[#allocation5 + $0x428] sm:$0xff]
        %v369 = vld [vmem:[#allocation5 + $0x430] sm:$0xff]
        %v370 = vld [vmem:[#allocation5 + $0x438] sm:$0xff]
        %v371 = vld [vmem:[#allocation5 + $0x440] sm:$0xff]
        %v372 = vld [vmem:[#allocation5 + $0x448] sm:$0xff]
        %v373 = vld [vmem:[#allocation5 + $0x450] sm:$0xff]
        %v374 = vld [vmem:[#allocation5 + $0x458] sm:$0xff]
        %v375 = vld [vmem:[#allocation5 + $0x460] sm:$0xff]
        %v376 = vld [vmem:[#allocation5 + $0x468] sm:$0xff]
        %v377 = vld [vmem:[#allocation5 + $0x470] sm:$0xff]
        %v378 = vld [vmem:[#allocation5 + $0x478] sm:$0xff]
        %v379 = vld [vmem:[#allocation5 + $0x480] sm:$0xff]
        %v380 = vld [vmem:[#allocation5 + $0x488] sm:$0xff]
        %v381 = vld [vmem:[#allocation5 + $0x490] sm:$0xff]
        %v382 = vld [vmem:[#allocation5 + $0x498] sm:$0xff]
        %v383 = vld [vmem:[#allocation5 + $0x4a0] sm:$0xff]
        %v384 = vld [vmem:[#allocation5 + $0x4a8] sm:$0xff]
        %v385 = vld [vmem:[#allocation5 + $0x4b0] sm:$0xff]
        %v386 = vld [vmem:[#allocation5 + $0x4b8] sm:$0xff]
        %v387 = vld [vmem:[#allocation5 + $0x4c0] sm:$0xff]
        %v388 = vld [vmem:[#allocation5 + $0x4c8] sm:$0xff]
        %v389 = vld [vmem:[#allocation5 + $0x4d0] sm:$0xff]
        %v390 = vld [vmem:[#allocation5 + $0x4d8] sm:$0xff]
        %v391 = vld [vmem:[#allocation5 + $0x4e0] sm:$0xff]
        %v392 = vld [vmem:[#allocation5 + $0x4e8] sm:$0xff]
        %v393 = vld [vmem:[#allocation5 + $0x4f0] sm:$0xff]
        %v394 = vld [vmem:[#allocation5 + $0x4f8] sm:$0xff]
        %v395 = vld [vmem:[#allocation5 + $0x500] sm:$0xff]
        %v396 = vld [vmem:[#allocation5 + $0x508] sm:$0xff]
        %v397 = vld [vmem:[#allocation5 + $0x510] sm:$0xff]
        %v398 = vld [vmem:[#allocation5 + $0x518] sm:$0xff]
        %v399 = vld [vmem:[#allocation5 + $0x520] sm:$0xff]
        %v400 = vld [vmem:[#allocation5 + $0x528] sm:$0xff]
        %v401 = vld [vmem:[#allocation5 + $0x530] sm:$0xff]
        %v402 = vld [vmem:[#allocation5 + $0x538] sm:$0xff]
        %v403 = vld [vmem:[#allocation5 + $0x540] sm:$0xff]
        %v404 = vld [vmem:[#allocation5 + $0x548] sm:$0xff]
        %v405 = vld [vmem:[#allocation5 + $0x550] sm:$0xff]
        %v406 = vld [vmem:[#allocation5 + $0x558] sm:$0xff]
        %v407 = vld [vmem:[#allocation5 + $0x560] sm:$0xff]
        %v408 = vld [vmem:[#allocation5 + $0x568] sm:$0xff]
        %v409 = vld [vmem:[#allocation5 + $0x570] sm:$0xff]
        %v410 = vld [vmem:[#allocation5 + $0x578] sm:$0xff]
        %v411 = vld [vmem:[#allocation5 + $0x580] sm:$0xff]
        %v412 = vld [vmem:[#allocation5 + $0x588] sm:$0xff]
        %v413 = vld [vmem:[#allocation5 + $0x590] sm:$0xff]
        %v414 = vld [vmem:[#allocation5 + $0x598] sm:$0xff]
        %v415 = vld [vmem:[#allocation5 + $0x5a0] sm:$0xff]
        %v416 = vld [vmem:[#allocation5 + $0x5a8] sm:$0xff]
        %v417 = vld [vmem:[#allocation5 + $0x5b0] sm:$0xff]
        %v418 = vld [vmem:[#allocation5 + $0x5b8] sm:$0xff]
        %v419 = vld [vmem:[#allocation5 + $0x5c0] sm:$0xff]
        %v420 = vld [vmem:[#allocation5 + $0x5c8] sm:$0xff]
        %v421 = vld [vmem:[#allocation5 + $0x5d0] sm:$0xff]
        %v422 = vld [vmem:[#allocation5 + $0x5d8] sm:$0xff]
        %v423 = vld [vmem:[#allocation5 + $0x5e0] sm:$0xff]
        %v424 = vld [vmem:[#allocation5 + $0x5e8] sm:$0xff]
        %v425 = vld [vmem:[#allocation5 + $0x5f0] sm:$0xff]
        %v426 = vld [vmem:[#allocation5 + $0x5f8] sm:$0xff]
        %v427 = vld [vmem:[#allocation5 + $0x600] sm:$0xff]
        %v428 = vld [vmem:[#allocation5 + $0x608] sm:$0xff]
        %v429 = vld [vmem:[#allocation5 + $0x610] sm:$0xff]
        %v430 = vld [vmem:[#allocation5 + $0x618] sm:$0xff]
        %v431 = vld [vmem:[#allocation5 + $0x620] sm:$0xff]
        %v432 = vld [vmem:[#allocation5 + $0x628] sm:$0xff]
        %v433 = vld [vmem:[#allocation5 + $0x630] sm:$0xff]
        %v434 = vld [vmem:[#allocation5 + $0x638] sm:$0xff]
        %v435 = vld [vmem:[#allocation5 + $0x640] sm:$0xff]
        %v436 = vld [vmem:[#allocation5 + $0x648] sm:$0xff]
        %v437 = vld [vmem:[#allocation5 + $0x650] sm:$0xff]
        %v438 = vld [vmem:[#allocation5 + $0x658] sm:$0xff]
        %v439 = vld [vmem:[#allocation5 + $0x660] sm:$0xff]
        %v440 = vld [vmem:[#allocation5 + $0x668] sm:$0xff]
        %v441 = vld [vmem:[#allocation5 + $0x670] sm:$0xff]
        %v442 = vld [vmem:[#allocation5 + $0x678] sm:$0xff]
        %v443 = vld [vmem:[#allocation5 + $0x680] sm:$0xff]
        %v444 = vld [vmem:[#allocation5 + $0x688] sm:$0xff]
        %v445 = vld [vmem:[#allocation5 + $0x690] sm:$0xff]
        %v446 = vld [vmem:[#allocation5 + $0x698] sm:$0xff]
        %v447 = vld [vmem:[#allocation5 + $0x6a0] sm:$0xff]
        %v448 = vld [vmem:[#allocation5 + $0x6a8] sm:$0xff]
        %v449 = vld [vmem:[#allocation5 + $0x6b0] sm:$0xff]
        %v450 = vld [vmem:[#allocation5 + $0x6b8] sm:$0xff]
        %v451 = vld [vmem:[#allocation5 + $0x6c0] sm:$0xff]
        %v452 = vld [vmem:[#allocation5 + $0x6c8] sm:$0xff]
        %v453 = vld [vmem:[#allocation5 + $0x6d0] sm:$0xff]
        %v454 = vld [vmem:[#allocation5 + $0x6d8] sm:$0xff]
        %v455 = vld [vmem:[#allocation5 + $0x6e0] sm:$0xff]
        %v456 = vld [vmem:[#allocation5 + $0x6e8] sm:$0xff]
        %v457 = vld [vmem:[#allocation5 + $0x6f0] sm:$0xff]
        %v458 = vld [vmem:[#allocation5 + $0x6f8] sm:$0xff]
        %v459 = vld [vmem:[#allocation5 + $0x700] sm:$0xff]
        %v460 = vld [vmem:[#allocation5 + $0x708] sm:$0xff]
        %v461 = vld [vmem:[#allocation5 + $0x710] sm:$0xff]
        %v462 = vld [vmem:[#allocation5 + $0x718] sm:$0xff]
        %v463 = vld [vmem:[#allocation5 + $0x720] sm:$0xff]
        %v464 = vld [vmem:[#allocation5 + $0x728] sm:$0xff]
        %v465 = vld [vmem:[#allocation5 + $0x730] sm:$0xff]
        %v466 = vld [vmem:[#allocation5 + $0x738] sm:$0xff]
        %v467 = vld [vmem:[#allocation5 + $0x740] sm:$0xff]
        %v468 = vld [vmem:[#allocation5 + $0x748] sm:$0xff]
        %v469 = vld [vmem:[#allocation5 + $0x750] sm:$0xff]
        %v470 = vld [vmem:[#allocation5 + $0x758] sm:$0xff]
        %v471 = vld [vmem:[#allocation5 + $0x760] sm:$0xff]
        %v472 = vld [vmem:[#allocation5 + $0x768] sm:$0xff]
        %v473 = vld [vmem:[#allocation5 + $0x770] sm:$0xff]
        %v474 = vld [vmem:[#allocation5 + $0x778] sm:$0xff]
        %v475 = vld [vmem:[#allocation5 + $0x780] sm:$0xff]
        %v476 = vld [vmem:[#allocation5 + $0x788] sm:$0xff]
        %v477 = vld [vmem:[#allocation5 + $0x790] sm:$0xff]
        %v478 = vld [vmem:[#allocation5 + $0x798] sm:$0xff]
        %v479 = vld [vmem:[#allocation5 + $0x7a0] sm:$0xff]
        %v480 = vld [vmem:[#allocation5 + $0x7a8] sm:$0xff]
        %v481 = vld [vmem:[#allocation5 + $0x7b0] sm:$0xff]
        %v482 = vld [vmem:[#allocation5 + $0x7b8] sm:$0xff]
        %v483 = vld [vmem:[#allocation5 + $0x7c0] sm:$0xff]
        %v484 = vld [vmem:[#allocation5 + $0x7c8] sm:$0xff]
        %v485 = vld [vmem:[#allocation5 + $0x7d0] sm:$0xff]
        %v486 = vld [vmem:[#allocation5 + $0x7d8] sm:$0xff]
        %v487 = vld [vmem:[#allocation5 + $0x7e0] sm:$0xff]
        %v488 = vld [vmem:[#allocation5 + $0x7e8] sm:$0xff]
        %v489 = vld [vmem:[#allocation5 + $0x7f0] sm:$0xff]
        %v490 = vld [vmem:[#allocation5 + $0x7f8] sm:$0xff]
        %v491 = vld [vmem:[#allocation5 + $0x800] sm:$0xff]
        %v492 = vld [vmem:[#allocation5 + $0x808] sm:$0xff]
        %v493 = vld [vmem:[#allocation5 + $0x810] sm:$0xff]
        %v494 = vld [vmem:[#allocation5 + $0x818] sm:$0xff]
        %v495 = vld [vmem:[#allocation5 + $0x820] sm:$0xff]
        %v496 = vld [vmem:[#allocation5 + $0x828] sm:$0xff]
        %v497 = vld [vmem:[#allocation5 + $0x830] sm:$0xff]
        %v498 = vld [vmem:[#allocation5 + $0x838] sm:$0xff]
        %v499 = vld [vmem:[#allocation5 + $0x840] sm:$0xff]
        %v500 = vld [vmem:[#allocation5 + $0x848] sm:$0xff]
        %v501 = vld [vmem:[#allocation5 + $0x850] sm:$0xff]
        %v502 = vld [vmem:[#allocation5 + $0x858] sm:$0xff]
        %v503 = vld [vmem:[#allocation5 + $0x860] sm:$0xff]
        %v504 = vld [vmem:[#allocation5 + $0x868] sm:$0xff]
        %v505 = vld [vmem:[#allocation5 + $0x870] sm:$0xff]
        %v506 = vld [vmem:[#allocation5 + $0x878] sm:$0xff]
        %v507 = vld [vmem:[#allocation5 + $0x880] sm:$0xff]
        %v508 = vld [vmem:[#allocation5 + $0x888] sm:$0xff]
        %v509 = vld [vmem:[#allocation5 + $0x890] sm:$0xff]
        %v510 = vld [vmem:[#allocation5 + $0x898] sm:$0xff]
        %v511 = vld [vmem:[#allocation5 + $0x8a0] sm:$0xff]
        %v512 = vld [vmem:[#allocation5 + $0x8a8] sm:$0xff]
        %v513 = vld [vmem:[#allocation5 + $0x8b0] sm:$0xff]
        %v514 = vld [vmem:[#allocation5 + $0x8b8] sm:$0xff]
        %v515 = vld [vmem:[#allocation5 + $0x8c0] sm:$0xff]
        %v516 = vld [vmem:[#allocation5 + $0x8c8] sm:$0xff]
        %v517 = vld [vmem:[#allocation5 + $0x8d0] sm:$0xff]
        %v518 = vld [vmem:[#allocation5 + $0x8d8] sm:$0xff]
        %v519 = vld [vmem:[#allocation5 + $0x8e0] sm:$0xff]
        %v520 = vld [vmem:[#allocation5 + $0x8e8] sm:$0xff]
        %v521 = vld [vmem:[#allocation5 + $0x8f0] sm:$0xff]
        %v522 = vld [vmem:[#allocation5 + $0x8f8] sm:$0xff]
        %v523 = vld [vmem:[#allocation5 + $0x900] sm:$0xff]
        %v524 = vld [vmem:[#allocation5 + $0x908] sm:$0xff]
        %v525 = vld [vmem:[#allocation5 + $0x910] sm:$0xff]
        %v526 = vld [vmem:[#allocation5 + $0x918] sm:$0xff]
        %v527 = vld [vmem:[#allocation5 + $0x920] sm:$0xff]
        %v528 = vld [vmem:[#allocation5 + $0x928] sm:$0xff]
        %v529 = vld [vmem:[#allocation5 + $0x930] sm:$0xff]
        %v530 = vld [vmem:[#allocation5 + $0x938] sm:$0xff]
        %v531 = vld [vmem:[#allocation5 + $0x940] sm:$0xff]
        %v532 = vld [vmem:[#allocation5 + $0x948] sm:$0xff]
        %v533 = vld [vmem:[#allocation5 + $0x950] sm:$0xff]
        %v534 = vld [vmem:[#allocation5 + $0x958] sm:$0xff]
        %v535 = vld [vmem:[#allocation5 + $0x960] sm:$0xff]
        %v536 = vld [vmem:[#allocation5 + $0x968] sm:$0xff]
        %v537 = vld [vmem:[#allocation5 + $0x970] sm:$0xff]
        %v538 = vld [vmem:[#allocation5 + $0x978] sm:$0xff]
        %v539 = vld [vmem:[#allocation5 + $0x980] sm:$0xff]
        %v540 = vld [vmem:[#allocation5 + $0x988] sm:$0xff]
        %v541 = vld [vmem:[#allocation5 + $0x990] sm:$0xff]
        %v542 = vld [vmem:[#allocation5 + $0x998] sm:$0xff]
        %v543 = vld [vmem:[#allocation5 + $0x9a0] sm:$0xff]
        %v544 = vld [vmem:[#allocation5 + $0x9a8] sm:$0xff]
        %v545 = vld [vmem:[#allocation5 + $0x9b0] sm:$0xff]
        %v546 = vld [vmem:[#allocation5 + $0x9b8] sm:$0xff]
        %v547 = vld [vmem:[#allocation5 + $0x9c0] sm:$0xff]
        %v548 = vld [vmem:[#allocation5 + $0x9c8] sm:$0xff]
        %v549 = vld [vmem:[#allocation5 + $0x9d0] sm:$0xff]
        %v550 = vld [vmem:[#allocation5 + $0x9d8] sm:$0xff]
        %v551 = vld [vmem:[#allocation5 + $0x9e0] sm:$0xff]
        %v552 = vld [vmem:[#allocation5 + $0x9e8] sm:$0xff]
        %v553 = vld [vmem:[#allocation5 + $0x9f0] sm:$0xff]
        %v554 = vld [vmem:[#allocation5 + $0x9f8] sm:$0xff]
        %v555 = vld [vmem:[#allocation5 + $0xa00] sm:$0xff]
        %v556 = vld [vmem:[#allocation5 + $0xa08] sm:$0xff]
        %v557 = vld [vmem:[#allocation5 + $0xa10] sm:$0xff]
        %v558 = vld [vmem:[#allocation5 + $0xa18] sm:$0xff]
        %v559 = vld [vmem:[#allocation5 + $0xa20] sm:$0xff]
        %v560 = vld [vmem:[#allocation5 + $0xa28] sm:$0xff]
        %v561 = vld [vmem:[#allocation5 + $0xa30] sm:$0xff]
        %v562 = vld [vmem:[#allocation5 + $0xa38] sm:$0xff]
        %v563 = vld [vmem:[#allocation5 + $0xa40] sm:$0xff]
        %v564 = vld [vmem:[#allocation5 + $0xa48] sm:$0xff]
        %v565 = vld [vmem:[#allocation5 + $0xa50] sm:$0xff]
        %v566 = vld [vmem:[#allocation5 + $0xa58] sm:$0xff]
        %v567 = vld [vmem:[#allocation5 + $0xa60] sm:$0xff]
        %v568 = vld [vmem:[#allocation5 + $0xa68] sm:$0xff]
        %v569 = vld [vmem:[#allocation5 + $0xa70] sm:$0xff]
        %v570 = vld [vmem:[#allocation5 + $0xa78] sm:$0xff]
        %v571 = vld [vmem:[#allocation5 + $0xa80] sm:$0xff]
        %v572 = vld [vmem:[#allocation5 + $0xa88] sm:$0xff]
        %v573 = vld [vmem:[#allocation5 + $0xa90] sm:$0xff]
        %v574 = vld [vmem:[#allocation5 + $0xa98] sm:$0xff]
        %v575 = vld [vmem:[#allocation5 + $0xaa0] sm:$0xff]
        %v576 = vld [vmem:[#allocation5 + $0xaa8] sm:$0xff]
        %v577 = vld [vmem:[#allocation5 + $0xab0] sm:$0xff]
        %v578 = vld [vmem:[#allocation5 + $0xab8] sm:$0xff]
        %v579 = vld [vmem:[#allocation5 + $0xac0] sm:$0xff]
        %v580 = vld [vmem:[#allocation5 + $0xac8] sm:$0xff]
        %v581 = vld [vmem:[#allocation5 + $0xad0] sm:$0xff]
        %v582 = vld [vmem:[#allocation5 + $0xad8] sm:$0xff]
        %v583 = vld [vmem:[#allocation5 + $0xae0] sm:$0xff]
        %v584 = vld [vmem:[#allocation5 + $0xae8] sm:$0xff]
        %v585 = vld [vmem:[#allocation5 + $0xaf0] sm:$0xff]
        %v586 = vld [vmem:[#allocation5 + $0xaf8] sm:$0xff]
        %v587 = vld [vmem:[#allocation5 + $0xb00] sm:$0xff]
        %v588 = vld [vmem:[#allocation5 + $0xb08] sm:$0xff]
        %v589 = vld [vmem:[#allocation5 + $0xb10] sm:$0xff]
        %v590 = vld [vmem:[#allocation5 + $0xb18] sm:$0xff]
        %v591 = vld [vmem:[#allocation5 + $0xb20] sm:$0xff]
        %v592 = vld [vmem:[#allocation5 + $0xb28] sm:$0xff]
        %v593 = vld [vmem:[#allocation5 + $0xb30] sm:$0xff]
        %v594 = vld [vmem:[#allocation5 + $0xb38] sm:$0xff]
        %v595 = vld [vmem:[#allocation5 + $0xb40] sm:$0xff]
        %v596 = vld [vmem:[#allocation5 + $0xb48] sm:$0xff]
        %v597 = vld [vmem:[#allocation5 + $0xb50] sm:$0xff]
        %v598 = vld [vmem:[#allocation5 + $0xb58] sm:$0xff]
        %v599 = vld [vmem:[#allocation5 + $0xb60] sm:$0xff]
        %v600 = vld [vmem:[#allocation5 + $0xb68] sm:$0xff]
        %v601 = vld [vmem:[#allocation5 + $0xb70] sm:$0xff]
        %v602 = vld [vmem:[#allocation5 + $0xb78] sm:$0xff]
        %v603 = vld [vmem:[#allocation5 + $0xb80] sm:$0xff]
        %v604 = vld [vmem:[#allocation5 + $0xb88] sm:$0xff]
        %v605 = vld [vmem:[#allocation5 + $0xb90] sm:$0xff]
        %v606 = vld [vmem:[#allocation5 + $0xb98] sm:$0xff]
        %v607 = vld [vmem:[#allocation5 + $0xba0] sm:$0xff]
        %v608 = vld [vmem:[#allocation5 + $0xba8] sm:$0xff]
        %v609 = vld [vmem:[#allocation5 + $0xbb0] sm:$0xff]
        %v610 = vld [vmem:[#allocation5 + $0xbb8] sm:$0xff]
        %v611 = vld [vmem:[#allocation5 + $0xbc0] sm:$0xff]
        %v612 = vld [vmem:[#allocation5 + $0xbc8] sm:$0xff]
        %v613 = vld [vmem:[#allocation5 + $0xbd0] sm:$0xff]
        %v614 = vld [vmem:[#allocation5 + $0xbd8] sm:$0xff]
        %v615 = vld [vmem:[#allocation5 + $0xbe0] sm:$0xff]
        %v616 = vld [vmem:[#allocation5 + $0xbe8] sm:$0xff]
        %v617 = vld [vmem:[#allocation5 + $0xbf0] sm:$0xff]
        %v618 = vld [vmem:[#allocation5 + $0xbf8] sm:$0xff]
        %v627 = vunpack.c.l.b16 %v227
        %v628 = vunpack.c.h.b16 %v227
        %v629 = vunpack.c.l.b16 %v228
        %v630 = vunpack.c.h.b16 %v228
        %v631 = vunpack.c.l.b16 %v229
        %v632 = vunpack.c.h.b16 %v229
        %v633 = vunpack.c.l.b16 %v230
        %v634 = vunpack.c.h.b16 %v230
        %v635 = vunpack.c.l.b16 %v231
        %v636 = vunpack.c.h.b16 %v231
        %v637 = vunpack.c.l.b16 %v232
        %v638 = vunpack.c.h.b16 %v232
        %v639 = vunpack.c.l.b16 %v233
        %v640 = vunpack.c.h.b16 %v233
        %v641 = vunpack.c.l.b16 %v234
        %v642 = vunpack.c.h.b16 %v234
        %v643 = vpack.c.b16 %v635, %v627
        %v644 = vpack.c.b16 %v636, %v628
        %v645 = vpack.c.b16 %v637, %v629
        %v646 = vpack.c.b16 %v638, %v630
        %v647 = vpack.c.b16 %v639, %v631
        %v648 = vpack.c.b16 %v640, %v632
        %v649 = vpack.c.b16 %v641, %v633
        %v650 = vpack.c.b16 %v642, %v634
        %v1043 = vunpack.c.l.b16 %v235
        %v1044 = vunpack.c.h.b16 %v235
        %v1045 = vunpack.c.l.b16 %v236
        %v1046 = vunpack.c.h.b16 %v236
        %v1047 = vunpack.c.l.b16 %v237
        %v1048 = vunpack.c.h.b16 %v237
        %v1049 = vunpack.c.l.b16 %v238
        %v1050 = vunpack.c.h.b16 %v238
        %v1051 = vunpack.c.l.b16 %v239
        %v1052 = vunpack.c.h.b16 %v239
        %v1053 = vunpack.c.l.b16 %v240
        %v1054 = vunpack.c.h.b16 %v240
        %v1055 = vunpack.c.l.b16 %v241
        %v1056 = vunpack.c.h.b16 %v241
        %v1057 = vunpack.c.l.b16 %v242
        %v1058 = vunpack.c.h.b16 %v242
        %v1059 = vunpack.c.l.b16 %v243
        %v1060 = vunpack.c.h.b16 %v243
        %v1061 = vunpack.c.l.b16 %v244
        %v1062 = vunpack.c.h.b16 %v244
        %v1063 = vunpack.c.l.b16 %v245
        %v1064 = vunpack.c.h.b16 %v245
        %v1065 = vunpack.c.l.b16 %v246
        %v1066 = vunpack.c.h.b16 %v246
        %v1067 = vunpack.c.l.b16 %v247
        %v1068 = vunpack.c.h.b16 %v247
        %v1069 = vunpack.c.l.b16 %v248
        %v1070 = vunpack.c.h.b16 %v248
        %v1071 = vunpack.c.l.b16 %v249
        %v1072 = vunpack.c.h.b16 %v249
        %v1073 = vunpack.c.l.b16 %v250
        %v1074 = vunpack.c.h.b16 %v250
        %v1075 = vunpack.c.l.b16 %v251
        %v1076 = vunpack.c.h.b16 %v251
        %v1077 = vunpack.c.l.b16 %v252
        %v1078 = vunpack.c.h.b16 %v252
        %v1079 = vunpack.c.l.b16 %v253
        %v1080 = vunpack.c.h.b16 %v253
        %v1081 = vunpack.c.l.b16 %v254
        %v1082 = vunpack.c.h.b16 %v254
        %v1083 = vunpack.c.l.b16 %v255
        %v1084 = vunpack.c.h.b16 %v255
        %v1085 = vunpack.c.l.b16 %v256
        %v1086 = vunpack.c.h.b16 %v256
        %v1087 = vunpack.c.l.b16 %v257
        %v1088 = vunpack.c.h.b16 %v257
        %v1089 = vunpack.c.l.b16 %v258
        %v1090 = vunpack.c.h.b16 %v258
        %v1091 = vunpack.c.l.b16 %v259
        %v1092 = vunpack.c.h.b16 %v259
        %v1093 = vunpack.c.l.b16 %v260
        %v1094 = vunpack.c.h.b16 %v260
        %v1095 = vunpack.c.l.b16 %v261
        %v1096 = vunpack.c.h.b16 %v261
        %v1097 = vunpack.c.l.b16 %v262
        %v1098 = vunpack.c.h.b16 %v262
        %v1099 = vunpack.c.l.b16 %v263
        %v1100 = vunpack.c.h.b16 %v263
        %v1101 = vunpack.c.l.b16 %v264
        %v1102 = vunpack.c.h.b16 %v264
        %v1103 = vunpack.c.l.b16 %v265
        %v1104 = vunpack.c.h.b16 %v265
        %v1105 = vunpack.c.l.b16 %v266
        %v1106 = vunpack.c.h.b16 %v266
        %v1107 = vunpack.c.l.b16 %v267
        %v1108 = vunpack.c.h.b16 %v267
        %v1109 = vunpack.c.l.b16 %v268
        %v1110 = vunpack.c.h.b16 %v268
        %v1111 = vunpack.c.l.b16 %v269
        %v1112 = vunpack.c.h.b16 %v269
        %v1113 = vunpack.c.l.b16 %v270
        %v1114 = vunpack.c.h.b16 %v270
        %v1115 = vunpack.c.l.b16 %v271
        %v1116 = vunpack.c.h.b16 %v271
        %v1117 = vunpack.c.l.b16 %v272
        %v1118 = vunpack.c.h.b16 %v272
        %v1119 = vunpack.c.l.b16 %v273
        %v1120 = vunpack.c.h.b16 %v273
        %v1121 = vunpack.c.l.b16 %v274
        %v1122 = vunpack.c.h.b16 %v274
        %v1123 = vunpack.c.l.b16 %v275
        %v1124 = vunpack.c.h.b16 %v275
        %v1125 = vunpack.c.l.b16 %v276
        %v1126 = vunpack.c.h.b16 %v276
        %v1127 = vunpack.c.l.b16 %v277
        %v1128 = vunpack.c.h.b16 %v277
        %v1129 = vunpack.c.l.b16 %v278
        %v1130 = vunpack.c.h.b16 %v278
        %v1131 = vunpack.c.l.b16 %v279
        %v1132 = vunpack.c.h.b16 %v279
        %v1133 = vunpack.c.l.b16 %v280
        %v1134 = vunpack.c.h.b16 %v280
        %v1135 = vunpack.c.l.b16 %v281
        %v1136 = vunpack.c.h.b16 %v281
        %v1137 = vunpack.c.l.b16 %v282
        %v1138 = vunpack.c.h.b16 %v282
        %v1139 = vunpack.c.l.b16 %v283
        %v1140 = vunpack.c.h.b16 %v283
        %v1141 = vunpack.c.l.b16 %v284
        %v1142 = vunpack.c.h.b16 %v284
        %v1143 = vunpack.c.l.b16 %v285
        %v1144 = vunpack.c.h.b16 %v285
        %v1145 = vunpack.c.l.b16 %v286
        %v1146 = vunpack.c.h.b16 %v286
        %v1147 = vunpack.c.l.b16 %v287
        %v1148 = vunpack.c.h.b16 %v287
        %v1149 = vunpack.c.l.b16 %v288
        %v1150 = vunpack.c.h.b16 %v288
        %v1151 = vunpack.c.l.b16 %v289
        %v1152 = vunpack.c.h.b16 %v289
        %v1153 = vunpack.c.l.b16 %v290
        %v1154 = vunpack.c.h.b16 %v290
        %v1155 = vunpack.c.l.b16 %v291
        %v1156 = vunpack.c.h.b16 %v291
        %v1157 = vunpack.c.l.b16 %v292
        %v1158 = vunpack.c.h.b16 %v292
        %v1159 = vunpack.c.l.b16 %v293
        %v1160 = vunpack.c.h.b16 %v293
        %v1161 = vunpack.c.l.b16 %v294
        %v1162 = vunpack.c.h.b16 %v294
        %v1163 = vunpack.c.l.b16 %v295
        %v1164 = vunpack.c.h.b16 %v295
        %v1165 = vunpack.c.l.b16 %v296
        %v1166 = vunpack.c.h.b16 %v296
        %v1167 = vunpack.c.l.b16 %v297
        %v1168 = vunpack.c.h.b16 %v297
        %v1169 = vunpack.c.l.b16 %v298
        %v1170 = vunpack.c.h.b16 %v298
        %v1171 = vunpack.c.l.b16 %v299
        %v1172 = vunpack.c.h.b16 %v299
        %v1173 = vunpack.c.l.b16 %v300
        %v1174 = vunpack.c.h.b16 %v300
        %v1175 = vunpack.c.l.b16 %v301
        %v1176 = vunpack.c.h.b16 %v301
        %v1177 = vunpack.c.l.b16 %v302
        %v1178 = vunpack.c.h.b16 %v302
        %v1179 = vunpack.c.l.b16 %v303
        %v1180 = vunpack.c.h.b16 %v303
        %v1181 = vunpack.c.l.b16 %v304
        %v1182 = vunpack.c.h.b16 %v304
        %v1183 = vunpack.c.l.b16 %v305
        %v1184 = vunpack.c.h.b16 %v305
        %v1185 = vunpack.c.l.b16 %v306
        %v1186 = vunpack.c.h.b16 %v306
        %v1187 = vunpack.c.l.b16 %v307
        %v1188 = vunpack.c.h.b16 %v307
        %v1189 = vunpack.c.l.b16 %v308
        %v1190 = vunpack.c.h.b16 %v308
        %v1191 = vunpack.c.l.b16 %v309
        %v1192 = vunpack.c.h.b16 %v309
        %v1193 = vunpack.c.l.b16 %v310
        %v1194 = vunpack.c.h.b16 %v310
        %v1195 = vunpack.c.l.b16 %v311
        %v1196 = vunpack.c.h.b16 %v311
        %v1197 = vunpack.c.l.b16 %v312
        %v1198 = vunpack.c.h.b16 %v312
        %v1199 = vunpack.c.l.b16 %v313
        %v1200 = vunpack.c.h.b16 %v313
        %v1201 = vunpack.c.l.b16 %v314
        %v1202 = vunpack.c.h.b16 %v314
        %v1203 = vunpack.c.l.b16 %v315
        %v1204 = vunpack.c.h.b16 %v315
        %v1205 = vunpack.c.l.b16 %v316
        %v1206 = vunpack.c.h.b16 %v316
        %v1207 = vunpack.c.l.b16 %v317
        %v1208 = vunpack.c.h.b16 %v317
        %v1209 = vunpack.c.l.b16 %v318
        %v1210 = vunpack.c.h.b16 %v318
        %v1211 = vunpack.c.l.b16 %v319
        %v1212 = vunpack.c.h.b16 %v319
        %v1213 = vunpack.c.l.b16 %v320
        %v1214 = vunpack.c.h.b16 %v320
        %v1215 = vunpack.c.l.b16 %v321
        %v1216 = vunpack.c.h.b16 %v321
        %v1217 = vunpack.c.l.b16 %v322
        %v1218 = vunpack.c.h.b16 %v322
        %v1219 = vunpack.c.l.b16 %v323
        %v1220 = vunpack.c.h.b16 %v323
        %v1221 = vunpack.c.l.b16 %v324
        %v1222 = vunpack.c.h.b16 %v324
        %v1223 = vunpack.c.l.b16 %v325
        %v1224 = vunpack.c.h.b16 %v325
        %v1225 = vunpack.c.l.b16 %v326
        %v1226 = vunpack.c.h.b16 %v326
        %v1227 = vunpack.c.l.b16 %v327
        %v1228 = vunpack.c.h.b16 %v327
        %v1229 = vunpack.c.l.b16 %v328
        %v1230 = vunpack.c.h.b16 %v328
        %v1231 = vunpack.c.l.b16 %v329
        %v1232 = vunpack.c.h.b16 %v329
        %v1233 = vunpack.c.l.b16 %v330
        %v1234 = vunpack.c.h.b16 %v330
        %v1235 = vunpack.c.l.b16 %v331
        %v1236 = vunpack.c.h.b16 %v331
        %v1237 = vunpack.c.l.b16 %v332
        %v1238 = vunpack.c.h.b16 %v332
        %v1239 = vunpack.c.l.b16 %v333
        %v1240 = vunpack.c.h.b16 %v333
        %v1241 = vunpack.c.l.b16 %v334
        %v1242 = vunpack.c.h.b16 %v334
        %v1243 = vunpack.c.l.b16 %v335
        %v1244 = vunpack.c.h.b16 %v335
        %v1245 = vunpack.c.l.b16 %v336
        %v1246 = vunpack.c.h.b16 %v336
        %v1247 = vunpack.c.l.b16 %v337
        %v1248 = vunpack.c.h.b16 %v337
        %v1249 = vunpack.c.l.b16 %v338
        %v1250 = vunpack.c.h.b16 %v338
        %v1251 = vunpack.c.l.b16 %v339
        %v1252 = vunpack.c.h.b16 %v339
        %v1253 = vunpack.c.l.b16 %v340
        %v1254 = vunpack.c.h.b16 %v340
        %v1255 = vunpack.c.l.b16 %v341
        %v1256 = vunpack.c.h.b16 %v341
        %v1257 = vunpack.c.l.b16 %v342
        %v1258 = vunpack.c.h.b16 %v342
        %v1259 = vunpack.c.l.b16 %v343
        %v1260 = vunpack.c.h.b16 %v343
        %v1261 = vunpack.c.l.b16 %v344
        %v1262 = vunpack.c.h.b16 %v344
        %v1263 = vunpack.c.l.b16 %v345
        %v1264 = vunpack.c.h.b16 %v345
        %v1265 = vunpack.c.l.b16 %v346
        %v1266 = vunpack.c.h.b16 %v346
        %v1267 = vunpack.c.l.b16 %v347
        %v1268 = vunpack.c.h.b16 %v347
        %v1269 = vunpack.c.l.b16 %v348
        %v1270 = vunpack.c.h.b16 %v348
        %v1271 = vunpack.c.l.b16 %v349
        %v1272 = vunpack.c.h.b16 %v349
        %v1273 = vunpack.c.l.b16 %v350
        %v1274 = vunpack.c.h.b16 %v350
        %v1275 = vunpack.c.l.b16 %v351
        %v1276 = vunpack.c.h.b16 %v351
        %v1277 = vunpack.c.l.b16 %v352
        %v1278 = vunpack.c.h.b16 %v352
        %v1279 = vunpack.c.l.b16 %v353
        %v1280 = vunpack.c.h.b16 %v353
        %v1281 = vunpack.c.l.b16 %v354
        %v1282 = vunpack.c.h.b16 %v354
        %v1283 = vunpack.c.l.b16 %v355
        %v1284 = vunpack.c.h.b16 %v355
        %v1285 = vunpack.c.l.b16 %v356
        %v1286 = vunpack.c.h.b16 %v356
        %v1287 = vunpack.c.l.b16 %v357
        %v1288 = vunpack.c.h.b16 %v357
        %v1289 = vunpack.c.l.b16 %v358
        %v1290 = vunpack.c.h.b16 %v358
        %v1291 = vunpack.c.l.b16 %v359
        %v1292 = vunpack.c.h.b16 %v359
        %v1293 = vunpack.c.l.b16 %v360
        %v1294 = vunpack.c.h.b16 %v360
        %v1295 = vunpack.c.l.b16 %v361
        %v1296 = vunpack.c.h.b16 %v361
        %v1297 = vunpack.c.l.b16 %v362
        %v1298 = vunpack.c.h.b16 %v362
        %v1299 = vunpack.c.l.b16 %v363
        %v1300 = vunpack.c.h.b16 %v363
        %v1301 = vunpack.c.l.b16 %v364
        %v1302 = vunpack.c.h.b16 %v364
        %v1303 = vunpack.c.l.b16 %v365
        %v1304 = vunpack.c.h.b16 %v365
        %v1305 = vunpack.c.l.b16 %v366
        %v1306 = vunpack.c.h.b16 %v366
        %v1307 = vunpack.c.l.b16 %v367
        %v1308 = vunpack.c.h.b16 %v367
        %v1309 = vunpack.c.l.b16 %v368
        %v1310 = vunpack.c.h.b16 %v368
        %v1311 = vunpack.c.l.b16 %v369
        %v1312 = vunpack.c.h.b16 %v369
        %v1313 = vunpack.c.l.b16 %v370
        %v1314 = vunpack.c.h.b16 %v370
        %v1315 = vunpack.c.l.b16 %v371
        %v1316 = vunpack.c.h.b16 %v371
        %v1317 = vunpack.c.l.b16 %v372
        %v1318 = vunpack.c.h.b16 %v372
        %v1319 = vunpack.c.l.b16 %v373
        %v1320 = vunpack.c.h.b16 %v373
        %v1321 = vunpack.c.l.b16 %v374
        %v1322 = vunpack.c.h.b16 %v374
        %v1323 = vunpack.c.l.b16 %v375
        %v1324 = vunpack.c.h.b16 %v375
        %v1325 = vunpack.c.l.b16 %v376
        %v1326 = vunpack.c.h.b16 %v376
        %v1327 = vunpack.c.l.b16 %v377
        %v1328 = vunpack.c.h.b16 %v377
        %v1329 = vunpack.c.l.b16 %v378
        %v1330 = vunpack.c.h.b16 %v378
        %v1331 = vunpack.c.l.b16 %v379
        %v1332 = vunpack.c.h.b16 %v379
        %v1333 = vunpack.c.l.b16 %v380
        %v1334 = vunpack.c.h.b16 %v380
        %v1335 = vunpack.c.l.b16 %v381
        %v1336 = vunpack.c.h.b16 %v381
        %v1337 = vunpack.c.l.b16 %v382
        %v1338 = vunpack.c.h.b16 %v382
        %v1339 = vunpack.c.l.b16 %v383
        %v1340 = vunpack.c.h.b16 %v383
        %v1341 = vunpack.c.l.b16 %v384
        %v1342 = vunpack.c.h.b16 %v384
        %v1343 = vunpack.c.l.b16 %v385
        %v1344 = vunpack.c.h.b16 %v385
        %v1345 = vunpack.c.l.b16 %v386
        %v1346 = vunpack.c.h.b16 %v386
        %v1347 = vunpack.c.l.b16 %v387
        %v1348 = vunpack.c.h.b16 %v387
        %v1349 = vunpack.c.l.b16 %v388
        %v1350 = vunpack.c.h.b16 %v388
        %v1351 = vunpack.c.l.b16 %v389
        %v1352 = vunpack.c.h.b16 %v389
        %v1353 = vunpack.c.l.b16 %v390
        %v1354 = vunpack.c.h.b16 %v390
        %v1355 = vunpack.c.l.b16 %v391
        %v1356 = vunpack.c.h.b16 %v391
        %v1357 = vunpack.c.l.b16 %v392
        %v1358 = vunpack.c.h.b16 %v392
        %v1359 = vunpack.c.l.b16 %v393
        %v1360 = vunpack.c.h.b16 %v393
        %v1361 = vunpack.c.l.b16 %v394
        %v1362 = vunpack.c.h.b16 %v394
        %v1363 = vunpack.c.l.b16 %v395
        %v1364 = vunpack.c.h.b16 %v395
        %v1365 = vunpack.c.l.b16 %v396
        %v1366 = vunpack.c.h.b16 %v396
        %v1367 = vunpack.c.l.b16 %v397
        %v1368 = vunpack.c.h.b16 %v397
        %v1369 = vunpack.c.l.b16 %v398
        %v1370 = vunpack.c.h.b16 %v398
        %v1371 = vunpack.c.l.b16 %v399
        %v1372 = vunpack.c.h.b16 %v399
        %v1373 = vunpack.c.l.b16 %v400
        %v1374 = vunpack.c.h.b16 %v400
        %v1375 = vunpack.c.l.b16 %v401
        %v1376 = vunpack.c.h.b16 %v401
        %v1377 = vunpack.c.l.b16 %v402
        %v1378 = vunpack.c.h.b16 %v402
        %v1379 = vunpack.c.l.b16 %v403
        %v1380 = vunpack.c.h.b16 %v403
        %v1381 = vunpack.c.l.b16 %v404
        %v1382 = vunpack.c.h.b16 %v404
        %v1383 = vunpack.c.l.b16 %v405
        %v1384 = vunpack.c.h.b16 %v405
        %v1385 = vunpack.c.l.b16 %v406
        %v1386 = vunpack.c.h.b16 %v406
        %v1387 = vunpack.c.l.b16 %v407
        %v1388 = vunpack.c.h.b16 %v407
        %v1389 = vunpack.c.l.b16 %v408
        %v1390 = vunpack.c.h.b16 %v408
        %v1391 = vunpack.c.l.b16 %v409
        %v1392 = vunpack.c.h.b16 %v409
        %v1393 = vunpack.c.l.b16 %v410
        %v1394 = vunpack.c.h.b16 %v410
        %v1395 = vunpack.c.l.b16 %v411
        %v1396 = vunpack.c.h.b16 %v411
        %v1397 = vunpack.c.l.b16 %v412
        %v1398 = vunpack.c.h.b16 %v412
        %v1399 = vunpack.c.l.b16 %v413
        %v1400 = vunpack.c.h.b16 %v413
        %v1401 = vunpack.c.l.b16 %v414
        %v1402 = vunpack.c.h.b16 %v414
        %v1403 = vunpack.c.l.b16 %v415
        %v1404 = vunpack.c.h.b16 %v415
        %v1405 = vunpack.c.l.b16 %v416
        %v1406 = vunpack.c.h.b16 %v416
        %v1407 = vunpack.c.l.b16 %v417
        %v1408 = vunpack.c.h.b16 %v417
        %v1409 = vunpack.c.l.b16 %v418
        %v1410 = vunpack.c.h.b16 %v418
        %v1411 = vunpack.c.l.b16 %v419
        %v1412 = vunpack.c.h.b16 %v419
        %v1413 = vunpack.c.l.b16 %v420
        %v1414 = vunpack.c.h.b16 %v420
        %v1415 = vunpack.c.l.b16 %v421
        %v1416 = vunpack.c.h.b16 %v421
        %v1417 = vunpack.c.l.b16 %v422
        %v1418 = vunpack.c.h.b16 %v422
        %v1419 = vunpack.c.l.b16 %v423
        %v1420 = vunpack.c.h.b16 %v423
        %v1421 = vunpack.c.l.b16 %v424
        %v1422 = vunpack.c.h.b16 %v424
        %v1423 = vunpack.c.l.b16 %v425
        %v1424 = vunpack.c.h.b16 %v425
        %v1425 = vunpack.c.l.b16 %v426
        %v1426 = vunpack.c.h.b16 %v426
        %v1427 = vunpack.c.l.b16 %v427
        %v1428 = vunpack.c.h.b16 %v427
        %v1429 = vunpack.c.l.b16 %v428
        %v1430 = vunpack.c.h.b16 %v428
        %v1431 = vunpack.c.l.b16 %v429
        %v1432 = vunpack.c.h.b16 %v429
        %v1433 = vunpack.c.l.b16 %v430
        %v1434 = vunpack.c.h.b16 %v430
        %v1435 = vunpack.c.l.b16 %v431
        %v1436 = vunpack.c.h.b16 %v431
        %v1437 = vunpack.c.l.b16 %v432
        %v1438 = vunpack.c.h.b16 %v432
        %v1439 = vunpack.c.l.b16 %v433
        %v1440 = vunpack.c.h.b16 %v433
        %v1441 = vunpack.c.l.b16 %v434
        %v1442 = vunpack.c.h.b16 %v434
        %v1443 = vunpack.c.l.b16 %v435
        %v1444 = vunpack.c.h.b16 %v435
        %v1445 = vunpack.c.l.b16 %v436
        %v1446 = vunpack.c.h.b16 %v436
        %v1447 = vunpack.c.l.b16 %v437
        %v1448 = vunpack.c.h.b16 %v437
        %v1449 = vunpack.c.l.b16 %v438
        %v1450 = vunpack.c.h.b16 %v438
        %v1451 = vunpack.c.l.b16 %v439
        %v1452 = vunpack.c.h.b16 %v439
        %v1453 = vunpack.c.l.b16 %v440
        %v1454 = vunpack.c.h.b16 %v440
        %v1455 = vunpack.c.l.b16 %v441
        %v1456 = vunpack.c.h.b16 %v441
        %v1457 = vunpack.c.l.b16 %v442
        %v1458 = vunpack.c.h.b16 %v442
        %v1459 = vunpack.c.l.b16 %v443
        %v1460 = vunpack.c.h.b16 %v443
        %v1461 = vunpack.c.l.b16 %v444
        %v1462 = vunpack.c.h.b16 %v444
        %v1463 = vunpack.c.l.b16 %v445
        %v1464 = vunpack.c.h.b16 %v445
        %v1465 = vunpack.c.l.b16 %v446
        %v1466 = vunpack.c.h.b16 %v446
        %v1467 = vunpack.c.l.b16 %v447
        %v1468 = vunpack.c.h.b16 %v447
        %v1469 = vunpack.c.l.b16 %v448
        %v1470 = vunpack.c.h.b16 %v448
        %v1471 = vunpack.c.l.b16 %v449
        %v1472 = vunpack.c.h.b16 %v449
        %v1473 = vunpack.c.l.b16 %v450
        %v1474 = vunpack.c.h.b16 %v450
        %v1475 = vunpack.c.l.b16 %v451
        %v1476 = vunpack.c.h.b16 %v451
        %v1477 = vunpack.c.l.b16 %v452
        %v1478 = vunpack.c.h.b16 %v452
        %v1479 = vunpack.c.l.b16 %v453
        %v1480 = vunpack.c.h.b16 %v453
        %v1481 = vunpack.c.l.b16 %v454
        %v1482 = vunpack.c.h.b16 %v454
        %v1483 = vunpack.c.l.b16 %v455
        %v1484 = vunpack.c.h.b16 %v455
        %v1485 = vunpack.c.l.b16 %v456
        %v1486 = vunpack.c.h.b16 %v456
        %v1487 = vunpack.c.l.b16 %v457
        %v1488 = vunpack.c.h.b16 %v457
        %v1489 = vunpack.c.l.b16 %v458
        %v1490 = vunpack.c.h.b16 %v458
        %v1491 = vunpack.c.l.b16 %v459
        %v1492 = vunpack.c.h.b16 %v459
        %v1493 = vunpack.c.l.b16 %v460
        %v1494 = vunpack.c.h.b16 %v460
        %v1495 = vunpack.c.l.b16 %v461
        %v1496 = vunpack.c.h.b16 %v461
        %v1497 = vunpack.c.l.b16 %v462
        %v1498 = vunpack.c.h.b16 %v462
        %v1499 = vunpack.c.l.b16 %v463
        %v1500 = vunpack.c.h.b16 %v463
        %v1501 = vunpack.c.l.b16 %v464
        %v1502 = vunpack.c.h.b16 %v464
        %v1503 = vunpack.c.l.b16 %v465
        %v1504 = vunpack.c.h.b16 %v465
        %v1505 = vunpack.c.l.b16 %v466
        %v1506 = vunpack.c.h.b16 %v466
        %v1507 = vunpack.c.l.b16 %v467
        %v1508 = vunpack.c.h.b16 %v467
        %v1509 = vunpack.c.l.b16 %v468
        %v1510 = vunpack.c.h.b16 %v468
        %v1511 = vunpack.c.l.b16 %v469
        %v1512 = vunpack.c.h.b16 %v469
        %v1513 = vunpack.c.l.b16 %v470
        %v1514 = vunpack.c.h.b16 %v470
        %v1515 = vunpack.c.l.b16 %v471
        %v1516 = vunpack.c.h.b16 %v471
        %v1517 = vunpack.c.l.b16 %v472
        %v1518 = vunpack.c.h.b16 %v472
        %v1519 = vunpack.c.l.b16 %v473
        %v1520 = vunpack.c.h.b16 %v473
        %v1521 = vunpack.c.l.b16 %v474
        %v1522 = vunpack.c.h.b16 %v474
        %v1523 = vunpack.c.l.b16 %v475
        %v1524 = vunpack.c.h.b16 %v475
        %v1525 = vunpack.c.l.b16 %v476
        %v1526 = vunpack.c.h.b16 %v476
        %v1527 = vunpack.c.l.b16 %v477
        %v1528 = vunpack.c.h.b16 %v477
        %v1529 = vunpack.c.l.b16 %v478
        %v1530 = vunpack.c.h.b16 %v478
        %v1531 = vunpack.c.l.b16 %v479
        %v1532 = vunpack.c.h.b16 %v479
        %v1533 = vunpack.c.l.b16 %v480
        %v1534 = vunpack.c.h.b16 %v480
        %v1535 = vunpack.c.l.b16 %v481
        %v1536 = vunpack.c.h.b16 %v481
        %v1537 = vunpack.c.l.b16 %v482
        %v1538 = vunpack.c.h.b16 %v482
        %v1539 = vunpack.c.l.b16 %v483
        %v1540 = vunpack.c.h.b16 %v483
        %v1541 = vunpack.c.l.b16 %v484
        %v1542 = vunpack.c.h.b16 %v484
        %v1543 = vunpack.c.l.b16 %v485
        %v1544 = vunpack.c.h.b16 %v485
        %v1545 = vunpack.c.l.b16 %v486
        %v1546 = vunpack.c.h.b16 %v486
        %v1547 = vunpack.c.l.b16 %v487
        %v1548 = vunpack.c.h.b16 %v487
        %v1549 = vunpack.c.l.b16 %v488
        %v1550 = vunpack.c.h.b16 %v488
        %v1551 = vunpack.c.l.b16 %v489
        %v1552 = vunpack.c.h.b16 %v489
        %v1553 = vunpack.c.l.b16 %v490
        %v1554 = vunpack.c.h.b16 %v490
        %v1555 = vunpack.c.l.b16 %v491
        %v1556 = vunpack.c.h.b16 %v491
        %v1557 = vunpack.c.l.b16 %v492
        %v1558 = vunpack.c.h.b16 %v492
        %v1559 = vunpack.c.l.b16 %v493
        %v1560 = vunpack.c.h.b16 %v493
        %v1561 = vunpack.c.l.b16 %v494
        %v1562 = vunpack.c.h.b16 %v494
        %v1563 = vunpack.c.l.b16 %v495
        %v1564 = vunpack.c.h.b16 %v495
        %v1565 = vunpack.c.l.b16 %v496
        %v1566 = vunpack.c.h.b16 %v496
        %v1567 = vunpack.c.l.b16 %v497
        %v1568 = vunpack.c.h.b16 %v497
        %v1569 = vunpack.c.l.b16 %v498
        %v1570 = vunpack.c.h.b16 %v498
        %v1571 = vunpack.c.l.b16 %v499
        %v1572 = vunpack.c.h.b16 %v499
        %v1573 = vunpack.c.l.b16 %v500
        %v1574 = vunpack.c.h.b16 %v500
        %v1575 = vunpack.c.l.b16 %v501
        %v1576 = vunpack.c.h.b16 %v501
        %v1577 = vunpack.c.l.b16 %v502
        %v1578 = vunpack.c.h.b16 %v502
        %v1579 = vunpack.c.l.b16 %v503
        %v1580 = vunpack.c.h.b16 %v503
        %v1581 = vunpack.c.l.b16 %v504
        %v1582 = vunpack.c.h.b16 %v504
        %v1583 = vunpack.c.l.b16 %v505
        %v1584 = vunpack.c.h.b16 %v505
        %v1585 = vunpack.c.l.b16 %v506
        %v1586 = vunpack.c.h.b16 %v506
        %v1587 = vunpack.c.l.b16 %v507
        %v1588 = vunpack.c.h.b16 %v507
        %v1589 = vunpack.c.l.b16 %v508
        %v1590 = vunpack.c.h.b16 %v508
        %v1591 = vunpack.c.l.b16 %v509
        %v1592 = vunpack.c.h.b16 %v509
        %v1593 = vunpack.c.l.b16 %v510
        %v1594 = vunpack.c.h.b16 %v510
        %v1595 = vunpack.c.l.b16 %v511
        %v1596 = vunpack.c.h.b16 %v511
        %v1597 = vunpack.c.l.b16 %v512
        %v1598 = vunpack.c.h.b16 %v512
        %v1599 = vunpack.c.l.b16 %v513
        %v1600 = vunpack.c.h.b16 %v513
        %v1601 = vunpack.c.l.b16 %v514
        %v1602 = vunpack.c.h.b16 %v514
        %v1603 = vunpack.c.l.b16 %v515
        %v1604 = vunpack.c.h.b16 %v515
        %v1605 = vunpack.c.l.b16 %v516
        %v1606 = vunpack.c.h.b16 %v516
        %v1607 = vunpack.c.l.b16 %v517
        %v1608 = vunpack.c.h.b16 %v517
        %v1609 = vunpack.c.l.b16 %v518
        %v1610 = vunpack.c.h.b16 %v518
        %v1611 = vunpack.c.l.b16 %v519
        %v1612 = vunpack.c.h.b16 %v519
        %v1613 = vunpack.c.l.b16 %v520
        %v1614 = vunpack.c.h.b16 %v520
        %v1615 = vunpack.c.l.b16 %v521
        %v1616 = vunpack.c.h.b16 %v521
        %v1617 = vunpack.c.l.b16 %v522
        %v1618 = vunpack.c.h.b16 %v522
        %v1619 = vunpack.c.l.b16 %v523
        %v1620 = vunpack.c.h.b16 %v523
        %v1621 = vunpack.c.l.b16 %v524
        %v1622 = vunpack.c.h.b16 %v524
        %v1623 = vunpack.c.l.b16 %v525
        %v1624 = vunpack.c.h.b16 %v525
        %v1625 = vunpack.c.l.b16 %v526
        %v1626 = vunpack.c.h.b16 %v526
        %v1627 = vunpack.c.l.b16 %v527
        %v1628 = vunpack.c.h.b16 %v527
        %v1629 = vunpack.c.l.b16 %v528
        %v1630 = vunpack.c.h.b16 %v528
        %v1631 = vunpack.c.l.b16 %v529
        %v1632 = vunpack.c.h.b16 %v529
        %v1633 = vunpack.c.l.b16 %v530
        %v1634 = vunpack.c.h.b16 %v530
        %v1635 = vunpack.c.l.b16 %v531
        %v1636 = vunpack.c.h.b16 %v531
        %v1637 = vunpack.c.l.b16 %v532
        %v1638 = vunpack.c.h.b16 %v532
        %v1639 = vunpack.c.l.b16 %v533
        %v1640 = vunpack.c.h.b16 %v533
        %v1641 = vunpack.c.l.b16 %v534
        %v1642 = vunpack.c.h.b16 %v534
        %v1643 = vunpack.c.l.b16 %v535
        %v1644 = vunpack.c.h.b16 %v535
        %v1645 = vunpack.c.l.b16 %v536
        %v1646 = vunpack.c.h.b16 %v536
        %v1647 = vunpack.c.l.b16 %v537
        %v1648 = vunpack.c.h.b16 %v537
        %v1649 = vunpack.c.l.b16 %v538
        %v1650 = vunpack.c.h.b16 %v538
        %v1651 = vunpack.c.l.b16 %v539
        %v1652 = vunpack.c.h.b16 %v539
        %v1653 = vunpack.c.l.b16 %v540
        %v1654 = vunpack.c.h.b16 %v540
        %v1655 = vunpack.c.l.b16 %v541
        %v1656 = vunpack.c.h.b16 %v541
        %v1657 = vunpack.c.l.b16 %v542
        %v1658 = vunpack.c.h.b16 %v542
        %v1659 = vunpack.c.l.b16 %v543
        %v1660 = vunpack.c.h.b16 %v543
        %v1661 = vunpack.c.l.b16 %v544
        %v1662 = vunpack.c.h.b16 %v544
        %v1663 = vunpack.c.l.b16 %v545
        %v1664 = vunpack.c.h.b16 %v545
        %v1665 = vunpack.c.l.b16 %v546
        %v1666 = vunpack.c.h.b16 %v546
        %v1667 = vunpack.c.l.b16 %v547
        %v1668 = vunpack.c.h.b16 %v547
        %v1669 = vunpack.c.l.b16 %v548
        %v1670 = vunpack.c.h.b16 %v548
        %v1671 = vunpack.c.l.b16 %v549
        %v1672 = vunpack.c.h.b16 %v549
        %v1673 = vunpack.c.l.b16 %v550
        %v1674 = vunpack.c.h.b16 %v550
        %v1675 = vunpack.c.l.b16 %v551
        %v1676 = vunpack.c.h.b16 %v551
        %v1677 = vunpack.c.l.b16 %v552
        %v1678 = vunpack.c.h.b16 %v552
        %v1679 = vunpack.c.l.b16 %v553
        %v1680 = vunpack.c.h.b16 %v553
        %v1681 = vunpack.c.l.b16 %v554
        %v1682 = vunpack.c.h.b16 %v554
        %v1683 = vunpack.c.l.b16 %v555
        %v1684 = vunpack.c.h.b16 %v555
        %v1685 = vunpack.c.l.b16 %v556
        %v1686 = vunpack.c.h.b16 %v556
        %v1687 = vunpack.c.l.b16 %v557
        %v1688 = vunpack.c.h.b16 %v557
        %v1689 = vunpack.c.l.b16 %v558
        %v1690 = vunpack.c.h.b16 %v558
        %v1691 = vunpack.c.l.b16 %v559
        %v1692 = vunpack.c.h.b16 %v559
        %v1693 = vunpack.c.l.b16 %v560
        %v1694 = vunpack.c.h.b16 %v560
        %v1695 = vunpack.c.l.b16 %v561
        %v1696 = vunpack.c.h.b16 %v561
        %v1697 = vunpack.c.l.b16 %v562
        %v1698 = vunpack.c.h.b16 %v562
        %v1699 = vunpack.c.l.b16 %v563
        %v1700 = vunpack.c.h.b16 %v563
        %v1701 = vunpack.c.l.b16 %v564
        %v1702 = vunpack.c.h.b16 %v564
        %v1703 = vunpack.c.l.b16 %v565
        %v1704 = vunpack.c.h.b16 %v565
        %v1705 = vunpack.c.l.b16 %v566
        %v1706 = vunpack.c.h.b16 %v566
        %v1707 = vunpack.c.l.b16 %v567
        %v1708 = vunpack.c.h.b16 %v567
        %v1709 = vunpack.c.l.b16 %v568
        %v1710 = vunpack.c.h.b16 %v568
        %v1711 = vunpack.c.l.b16 %v569
        %v1712 = vunpack.c.h.b16 %v569
        %v1713 = vunpack.c.l.b16 %v570
        %v1714 = vunpack.c.h.b16 %v570
        %v1715 = vunpack.c.l.b16 %v571
        %v1716 = vunpack.c.h.b16 %v571
        %v1717 = vunpack.c.l.b16 %v572
        %v1718 = vunpack.c.h.b16 %v572
        %v1719 = vunpack.c.l.b16 %v573
        %v1720 = vunpack.c.h.b16 %v573
        %v1721 = vunpack.c.l.b16 %v574
        %v1722 = vunpack.c.h.b16 %v574
        %v1723 = vunpack.c.l.b16 %v575
        %v1724 = vunpack.c.h.b16 %v575
        %v1725 = vunpack.c.l.b16 %v576
        %v1726 = vunpack.c.h.b16 %v576
        %v1727 = vunpack.c.l.b16 %v577
        %v1728 = vunpack.c.h.b16 %v577
        %v1729 = vunpack.c.l.b16 %v578
        %v1730 = vunpack.c.h.b16 %v578
        %v1731 = vunpack.c.l.b16 %v579
        %v1732 = vunpack.c.h.b16 %v579
        %v1733 = vunpack.c.l.b16 %v580
        %v1734 = vunpack.c.h.b16 %v580
        %v1735 = vunpack.c.l.b16 %v581
        %v1736 = vunpack.c.h.b16 %v581
        %v1737 = vunpack.c.l.b16 %v582
        %v1738 = vunpack.c.h.b16 %v582
        %v1739 = vunpack.c.l.b16 %v583
        %v1740 = vunpack.c.h.b16 %v583
        %v1741 = vunpack.c.l.b16 %v584
        %v1742 = vunpack.c.h.b16 %v584
        %v1743 = vunpack.c.l.b16 %v585
        %v1744 = vunpack.c.h.b16 %v585
        %v1745 = vunpack.c.l.b16 %v586
        %v1746 = vunpack.c.h.b16 %v586
        %v1747 = vunpack.c.l.b16 %v587
        %v1748 = vunpack.c.h.b16 %v587
        %v1749 = vunpack.c.l.b16 %v588
        %v1750 = vunpack.c.h.b16 %v588
        %v1751 = vunpack.c.l.b16 %v589
        %v1752 = vunpack.c.h.b16 %v589
        %v1753 = vunpack.c.l.b16 %v590
        %v1754 = vunpack.c.h.b16 %v590
        %v1755 = vunpack.c.l.b16 %v591
        %v1756 = vunpack.c.h.b16 %v591
        %v1757 = vunpack.c.l.b16 %v592
        %v1758 = vunpack.c.h.b16 %v592
        %v1759 = vunpack.c.l.b16 %v593
        %v1760 = vunpack.c.h.b16 %v593
        %v1761 = vunpack.c.l.b16 %v594
        %v1762 = vunpack.c.h.b16 %v594
        %v1763 = vunpack.c.l.b16 %v595
        %v1764 = vunpack.c.h.b16 %v595
        %v1765 = vunpack.c.l.b16 %v596
        %v1766 = vunpack.c.h.b16 %v596
        %v1767 = vunpack.c.l.b16 %v597
        %v1768 = vunpack.c.h.b16 %v597
        %v1769 = vunpack.c.l.b16 %v598
        %v1770 = vunpack.c.h.b16 %v598
        %v1771 = vunpack.c.l.b16 %v599
        %v1772 = vunpack.c.h.b16 %v599
        %v1773 = vunpack.c.l.b16 %v600
        %v1774 = vunpack.c.h.b16 %v600
        %v1775 = vunpack.c.l.b16 %v601
        %v1776 = vunpack.c.h.b16 %v601
        %v1777 = vunpack.c.l.b16 %v602
        %v1778 = vunpack.c.h.b16 %v602
        %v1779 = vunpack.c.l.b16 %v603
        %v1780 = vunpack.c.h.b16 %v603
        %v1781 = vunpack.c.l.b16 %v604
        %v1782 = vunpack.c.h.b16 %v604
        %v1783 = vunpack.c.l.b16 %v605
        %v1784 = vunpack.c.h.b16 %v605
        %v1785 = vunpack.c.l.b16 %v606
        %v1786 = vunpack.c.h.b16 %v606
        %v1787 = vunpack.c.l.b16 %v607
        %v1788 = vunpack.c.h.b16 %v607
        %v1789 = vunpack.c.l.b16 %v608
        %v1790 = vunpack.c.h.b16 %v608
        %v1791 = vunpack.c.l.b16 %v609
        %v1792 = vunpack.c.h.b16 %v609
        %v1793 = vunpack.c.l.b16 %v610
        %v1794 = vunpack.c.h.b16 %v610
        %v1795 = vunpack.c.l.b16 %v611
        %v1796 = vunpack.c.h.b16 %v611
        %v1797 = vunpack.c.l.b16 %v612
        %v1798 = vunpack.c.h.b16 %v612
        %v1799 = vunpack.c.l.b16 %v613
        %v1800 = vunpack.c.h.b16 %v613
        %v1801 = vunpack.c.l.b16 %v614
        %v1802 = vunpack.c.h.b16 %v614
        %v1803 = vunpack.c.l.b16 %v615
        %v1804 = vunpack.c.h.b16 %v615
        %v1805 = vunpack.c.l.b16 %v616
        %v1806 = vunpack.c.h.b16 %v616
        %v1807 = vunpack.c.l.b16 %v617
        %v1808 = vunpack.c.h.b16 %v617
        %v1809 = vunpack.c.l.b16 %v618
        %v1810 = vunpack.c.h.b16 %v618
        %v1811 = vpack.c.b16 %v1049, %v1043
        %v1812 = vpack.c.b16 %v1050, %v1044
        %v1813 = vpack.c.b16 %v1051, %v1045
        %v1814 = vpack.c.b16 %v1052, %v1046
        %v1815 = vpack.c.b16 %v1053, %v1047
        %v1816 = vpack.c.b16 %v1054, %v1048
        %v1817 = vpack.c.b16 %v1061, %v1055
        %v1818 = vpack.c.b16 %v1062, %v1056
        %v1819 = vpack.c.b16 %v1063, %v1057
        %v1820 = vpack.c.b16 %v1064, %v1058
        %v1821 = vpack.c.b16 %v1065, %v1059
        %v1822 = vpack.c.b16 %v1066, %v1060
        %v1823 = vpack.c.b16 %v1073, %v1067
        %v1824 = vpack.c.b16 %v1074, %v1068
        %v1825 = vpack.c.b16 %v1075, %v1069
        %v1826 = vpack.c.b16 %v1076, %v1070
        %v1827 = vpack.c.b16 %v1077, %v1071
        %v1828 = vpack.c.b16 %v1078, %v1072
        %v1829 = vpack.c.b16 %v1085, %v1079
        %v1830 = vpack.c.b16 %v1086, %v1080
        %v1831 = vpack.c.b16 %v1087, %v1081
        %v1832 = vpack.c.b16 %v1088, %v1082
        %v1833 = vpack.c.b16 %v1089, %v1083
        %v1834 = vpack.c.b16 %v1090, %v1084
        %v1835 = vpack.c.b16 %v1097, %v1091
        %v1836 = vpack.c.b16 %v1098, %v1092
        %v1837 = vpack.c.b16 %v1099, %v1093
        %v1838 = vpack.c.b16 %v1100, %v1094
        %v1839 = vpack.c.b16 %v1101, %v1095
        %v1840 = vpack.c.b16 %v1102, %v1096
        %v1841 = vpack.c.b16 %v1109, %v1103
        %v1842 = vpack.c.b16 %v1110, %v1104
        %v1843 = vpack.c.b16 %v1111, %v1105
        %v1844 = vpack.c.b16 %v1112, %v1106
        %v1845 = vpack.c.b16 %v1113, %v1107
        %v1846 = vpack.c.b16 %v1114, %v1108
        %v1847 = vpack.c.b16 %v1121, %v1115
        %v1848 = vpack.c.b16 %v1122, %v1116
        %v1849 = vpack.c.b16 %v1123, %v1117
        %v1850 = vpack.c.b16 %v1124, %v1118
        %v1851 = vpack.c.b16 %v1125, %v1119
        %v1852 = vpack.c.b16 %v1126, %v1120
        %v1853 = vpack.c.b16 %v1133, %v1127
        %v1854 = vpack.c.b16 %v1134, %v1128
        %v1855 = vpack.c.b16 %v1135, %v1129
        %v1856 = vpack.c.b16 %v1136, %v1130
        %v1857 = vpack.c.b16 %v1137, %v1131
        %v1858 = vpack.c.b16 %v1138, %v1132
        %v1859 = vpack.c.b16 %v1145, %v1139
        %v1860 = vpack.c.b16 %v1146, %v1140
        %v1861 = vpack.c.b16 %v1147, %v1141
        %v1862 = vpack.c.b16 %v1148, %v1142
        %v1863 = vpack.c.b16 %v1149, %v1143
        %v1864 = vpack.c.b16 %v1150, %v1144
        %v1865 = vpack.c.b16 %v1157, %v1151
        %v1866 = vpack.c.b16 %v1158, %v1152
        %v1867 = vpack.c.b16 %v1159, %v1153
        %v1868 = vpack.c.b16 %v1160, %v1154
        %v1869 = vpack.c.b16 %v1161, %v1155
        %v1870 = vpack.c.b16 %v1162, %v1156
        %v1871 = vpack.c.b16 %v1169, %v1163
        %v1872 = vpack.c.b16 %v1170, %v1164
        %v1873 = vpack.c.b16 %v1171, %v1165
        %v1874 = vpack.c.b16 %v1172, %v1166
        %v1875 = vpack.c.b16 %v1173, %v1167
        %v1876 = vpack.c.b16 %v1174, %v1168
        %v1877 = vpack.c.b16 %v1181, %v1175
        %v1878 = vpack.c.b16 %v1182, %v1176
        %v1879 = vpack.c.b16 %v1183, %v1177
        %v1880 = vpack.c.b16 %v1184, %v1178
        %v1881 = vpack.c.b16 %v1185, %v1179
        %v1882 = vpack.c.b16 %v1186, %v1180
        %v1883 = vpack.c.b16 %v1193, %v1187
        %v1884 = vpack.c.b16 %v1194, %v1188
        %v1885 = vpack.c.b16 %v1195, %v1189
        %v1886 = vpack.c.b16 %v1196, %v1190
        %v1887 = vpack.c.b16 %v1197, %v1191
        %v1888 = vpack.c.b16 %v1198, %v1192
        %v1889 = vpack.c.b16 %v1205, %v1199
        %v1890 = vpack.c.b16 %v1206, %v1200
        %v1891 = vpack.c.b16 %v1207, %v1201
        %v1892 = vpack.c.b16 %v1208, %v1202
        %v1893 = vpack.c.b16 %v1209, %v1203
        %v1894 = vpack.c.b16 %v1210, %v1204
        %v1895 = vpack.c.b16 %v1217, %v1211
        %v1896 = vpack.c.b16 %v1218, %v1212
        %v1897 = vpack.c.b16 %v1219, %v1213
        %v1898 = vpack.c.b16 %v1220, %v1214
        %v1899 = vpack.c.b16 %v1221, %v1215
        %v1900 = vpack.c.b16 %v1222, %v1216
        %v1901 = vpack.c.b16 %v1229, %v1223
        %v1902 = vpack.c.b16 %v1230, %v1224
        %v1903 = vpack.c.b16 %v1231, %v1225
        %v1904 = vpack.c.b16 %v1232, %v1226
        %v1905 = vpack.c.b16 %v1233, %v1227
        %v1906 = vpack.c.b16 %v1234, %v1228
        %v1907 = vpack.c.b16 %v1241, %v1235
        %v1908 = vpack.c.b16 %v1242, %v1236
        %v1909 = vpack.c.b16 %v1243, %v1237
        %v1910 = vpack.c.b16 %v1244, %v1238
        %v1911 = vpack.c.b16 %v1245, %v1239
        %v1912 = vpack.c.b16 %v1246, %v1240
        %v1913 = vpack.c.b16 %v1253, %v1247
        %v1914 = vpack.c.b16 %v1254, %v1248
        %v1915 = vpack.c.b16 %v1255, %v1249
        %v1916 = vpack.c.b16 %v1256, %v1250
        %v1917 = vpack.c.b16 %v1257, %v1251
        %v1918 = vpack.c.b16 %v1258, %v1252
        %v1919 = vpack.c.b16 %v1265, %v1259
        %v1920 = vpack.c.b16 %v1266, %v1260
        %v1921 = vpack.c.b16 %v1267, %v1261
        %v1922 = vpack.c.b16 %v1268, %v1262
        %v1923 = vpack.c.b16 %v1269, %v1263
        %v1924 = vpack.c.b16 %v1270, %v1264
        %v1925 = vpack.c.b16 %v1277, %v1271
        %v1926 = vpack.c.b16 %v1278, %v1272
        %v1927 = vpack.c.b16 %v1279, %v1273
        %v1928 = vpack.c.b16 %v1280, %v1274
        %v1929 = vpack.c.b16 %v1281, %v1275
        %v1930 = vpack.c.b16 %v1282, %v1276
        %v1931 = vpack.c.b16 %v1289, %v1283
        %v1932 = vpack.c.b16 %v1290, %v1284
        %v1933 = vpack.c.b16 %v1291, %v1285
        %v1934 = vpack.c.b16 %v1292, %v1286
        %v1935 = vpack.c.b16 %v1293, %v1287
        %v1936 = vpack.c.b16 %v1294, %v1288
        %v1937 = vpack.c.b16 %v1301, %v1295
        %v1938 = vpack.c.b16 %v1302, %v1296
        %v1939 = vpack.c.b16 %v1303, %v1297
        %v1940 = vpack.c.b16 %v1304, %v1298
        %v1941 = vpack.c.b16 %v1305, %v1299
        %v1942 = vpack.c.b16 %v1306, %v1300
        %v1943 = vpack.c.b16 %v1313, %v1307
        %v1944 = vpack.c.b16 %v1314, %v1308
        %v1945 = vpack.c.b16 %v1315, %v1309
        %v1946 = vpack.c.b16 %v1316, %v1310
        %v1947 = vpack.c.b16 %v1317, %v1311
        %v1948 = vpack.c.b16 %v1318, %v1312
        %v1949 = vpack.c.b16 %v1325, %v1319
        %v1950 = vpack.c.b16 %v1326, %v1320
        %v1951 = vpack.c.b16 %v1327, %v1321
        %v1952 = vpack.c.b16 %v1328, %v1322
        %v1953 = vpack.c.b16 %v1329, %v1323
        %v1954 = vpack.c.b16 %v1330, %v1324
        %v1955 = vpack.c.b16 %v1337, %v1331
        %v1956 = vpack.c.b16 %v1338, %v1332
        %v1957 = vpack.c.b16 %v1339, %v1333
        %v1958 = vpack.c.b16 %v1340, %v1334
        %v1959 = vpack.c.b16 %v1341, %v1335
        %v1960 = vpack.c.b16 %v1342, %v1336
        %v1961 = vpack.c.b16 %v1349, %v1343
        %v1962 = vpack.c.b16 %v1350, %v1344
        %v1963 = vpack.c.b16 %v1351, %v1345
        %v1964 = vpack.c.b16 %v1352, %v1346
        %v1965 = vpack.c.b16 %v1353, %v1347
        %v1966 = vpack.c.b16 %v1354, %v1348
        %v1967 = vpack.c.b16 %v1361, %v1355
        %v1968 = vpack.c.b16 %v1362, %v1356
        %v1969 = vpack.c.b16 %v1363, %v1357
        %v1970 = vpack.c.b16 %v1364, %v1358
        %v1971 = vpack.c.b16 %v1365, %v1359
        %v1972 = vpack.c.b16 %v1366, %v1360
        %v1973 = vpack.c.b16 %v1373, %v1367
        %v1974 = vpack.c.b16 %v1374, %v1368
        %v1975 = vpack.c.b16 %v1375, %v1369
        %v1976 = vpack.c.b16 %v1376, %v1370
        %v1977 = vpack.c.b16 %v1377, %v1371
        %v1978 = vpack.c.b16 %v1378, %v1372
        %v1979 = vpack.c.b16 %v1385, %v1379
        %v1980 = vpack.c.b16 %v1386, %v1380
        %v1981 = vpack.c.b16 %v1387, %v1381
        %v1982 = vpack.c.b16 %v1388, %v1382
        %v1983 = vpack.c.b16 %v1389, %v1383
        %v1984 = vpack.c.b16 %v1390, %v1384
        %v1985 = vpack.c.b16 %v1397, %v1391
        %v1986 = vpack.c.b16 %v1398, %v1392
        %v1987 = vpack.c.b16 %v1399, %v1393
        %v1988 = vpack.c.b16 %v1400, %v1394
        %v1989 = vpack.c.b16 %v1401, %v1395
        %v1990 = vpack.c.b16 %v1402, %v1396
        %v1991 = vpack.c.b16 %v1409, %v1403
        %v1992 = vpack.c.b16 %v1410, %v1404
        %v1993 = vpack.c.b16 %v1411, %v1405
        %v1994 = vpack.c.b16 %v1412, %v1406
        %v1995 = vpack.c.b16 %v1413, %v1407
        %v1996 = vpack.c.b16 %v1414, %v1408
        %v1997 = vpack.c.b16 %v1421, %v1415
        %v1998 = vpack.c.b16 %v1422, %v1416
        %v1999 = vpack.c.b16 %v1423, %v1417
        %v2000 = vpack.c.b16 %v1424, %v1418
        %v2001 = vpack.c.b16 %v1425, %v1419
        %v2002 = vpack.c.b16 %v1426, %v1420
        %v2003 = vpack.c.b16 %v1433, %v1427
        %v2004 = vpack.c.b16 %v1434, %v1428
        %v2005 = vpack.c.b16 %v1435, %v1429
        %v2006 = vpack.c.b16 %v1436, %v1430
        %v2007 = vpack.c.b16 %v1437, %v1431
        %v2008 = vpack.c.b16 %v1438, %v1432
        %v2009 = vpack.c.b16 %v1445, %v1439
        %v2010 = vpack.c.b16 %v1446, %v1440
        %v2011 = vpack.c.b16 %v1447, %v1441
        %v2012 = vpack.c.b16 %v1448, %v1442
        %v2013 = vpack.c.b16 %v1449, %v1443
        %v2014 = vpack.c.b16 %v1450, %v1444
        %v2015 = vpack.c.b16 %v1457, %v1451
        %v2016 = vpack.c.b16 %v1458, %v1452
        %v2017 = vpack.c.b16 %v1459, %v1453
        %v2018 = vpack.c.b16 %v1460, %v1454
        %v2019 = vpack.c.b16 %v1461, %v1455
        %v2020 = vpack.c.b16 %v1462, %v1456
        %v2021 = vpack.c.b16 %v1469, %v1463
        %v2022 = vpack.c.b16 %v1470, %v1464
        %v2023 = vpack.c.b16 %v1471, %v1465
        %v2024 = vpack.c.b16 %v1472, %v1466
        %v2025 = vpack.c.b16 %v1473, %v1467
        %v2026 = vpack.c.b16 %v1474, %v1468
        %v2027 = vpack.c.b16 %v1481, %v1475
        %v2028 = vpack.c.b16 %v1482, %v1476
        %v2029 = vpack.c.b16 %v1483, %v1477
        %v2030 = vpack.c.b16 %v1484, %v1478
        %v2031 = vpack.c.b16 %v1485, %v1479
        %v2032 = vpack.c.b16 %v1486, %v1480
        %v2033 = vpack.c.b16 %v1493, %v1487
        %v2034 = vpack.c.b16 %v1494, %v1488
        %v2035 = vpack.c.b16 %v1495, %v1489
        %v2036 = vpack.c.b16 %v1496, %v1490
        %v2037 = vpack.c.b16 %v1497, %v1491
        %v2038 = vpack.c.b16 %v1498, %v1492
        %v2039 = vpack.c.b16 %v1505, %v1499
        %v2040 = vpack.c.b16 %v1506, %v1500
        %v2041 = vpack.c.b16 %v1507, %v1501
        %v2042 = vpack.c.b16 %v1508, %v1502
        %v2043 = vpack.c.b16 %v1509, %v1503
        %v2044 = vpack.c.b16 %v1510, %v1504
        %v2045 = vpack.c.b16 %v1517, %v1511
        %v2046 = vpack.c.b16 %v1518, %v1512
        %v2047 = vpack.c.b16 %v1519, %v1513
        %v2048 = vpack.c.b16 %v1520, %v1514
        %v2049 = vpack.c.b16 %v1521, %v1515
        %v2050 = vpack.c.b16 %v1522, %v1516
        %v2051 = vpack.c.b16 %v1529, %v1523
        %v2052 = vpack.c.b16 %v1530, %v1524
        %v2053 = vpack.c.b16 %v1531, %v1525
        %v2054 = vpack.c.b16 %v1532, %v1526
        %v2055 = vpack.c.b16 %v1533, %v1527
        %v2056 = vpack.c.b16 %v1534, %v1528
        %v2057 = vpack.c.b16 %v1541, %v1535
        %v2058 = vpack.c.b16 %v1542, %v1536
        %v2059 = vpack.c.b16 %v1543, %v1537
        %v2060 = vpack.c.b16 %v1544, %v1538
        %v2061 = vpack.c.b16 %v1545, %v1539
        %v2062 = vpack.c.b16 %v1546, %v1540
        %v2063 = vpack.c.b16 %v1553, %v1547
        %v2064 = vpack.c.b16 %v1554, %v1548
        %v2065 = vpack.c.b16 %v1555, %v1549
        %v2066 = vpack.c.b16 %v1556, %v1550
        %v2067 = vpack.c.b16 %v1557, %v1551
        %v2068 = vpack.c.b16 %v1558, %v1552
        %v2069 = vpack.c.b16 %v1565, %v1559
        %v2070 = vpack.c.b16 %v1566, %v1560
        %v2071 = vpack.c.b16 %v1567, %v1561
        %v2072 = vpack.c.b16 %v1568, %v1562
        %v2073 = vpack.c.b16 %v1569, %v1563
        %v2074 = vpack.c.b16 %v1570, %v1564
        %v2075 = vpack.c.b16 %v1577, %v1571
        %v2076 = vpack.c.b16 %v1578, %v1572
        %v2077 = vpack.c.b16 %v1579, %v1573
        %v2078 = vpack.c.b16 %v1580, %v1574
        %v2079 = vpack.c.b16 %v1581, %v1575
        %v2080 = vpack.c.b16 %v1582, %v1576
        %v2081 = vpack.c.b16 %v1589, %v1583
        %v2082 = vpack.c.b16 %v1590, %v1584
        %v2083 = vpack.c.b16 %v1591, %v1585
        %v2084 = vpack.c.b16 %v1592, %v1586
        %v2085 = vpack.c.b16 %v1593, %v1587
        %v2086 = vpack.c.b16 %v1594, %v1588
        %v2087 = vpack.c.b16 %v1601, %v1595
        %v2088 = vpack.c.b16 %v1602, %v1596
        %v2089 = vpack.c.b16 %v1603, %v1597
        %v2090 = vpack.c.b16 %v1604, %v1598
        %v2091 = vpack.c.b16 %v1605, %v1599
        %v2092 = vpack.c.b16 %v1606, %v1600
        %v2093 = vpack.c.b16 %v1613, %v1607
        %v2094 = vpack.c.b16 %v1614, %v1608
        %v2095 = vpack.c.b16 %v1615, %v1609
        %v2096 = vpack.c.b16 %v1616, %v1610
        %v2097 = vpack.c.b16 %v1617, %v1611
        %v2098 = vpack.c.b16 %v1618, %v1612
        %v2099 = vpack.c.b16 %v1625, %v1619
        %v2100 = vpack.c.b16 %v1626, %v1620
        %v2101 = vpack.c.b16 %v1627, %v1621
        %v2102 = vpack.c.b16 %v1628, %v1622
        %v2103 = vpack.c.b16 %v1629, %v1623
        %v2104 = vpack.c.b16 %v1630, %v1624
        %v2105 = vpack.c.b16 %v1637, %v1631
        %v2106 = vpack.c.b16 %v1638, %v1632
        %v2107 = vpack.c.b16 %v1639, %v1633
        %v2108 = vpack.c.b16 %v1640, %v1634
        %v2109 = vpack.c.b16 %v1641, %v1635
        %v2110 = vpack.c.b16 %v1642, %v1636
        %v2111 = vpack.c.b16 %v1649, %v1643
        %v2112 = vpack.c.b16 %v1650, %v1644
        %v2113 = vpack.c.b16 %v1651, %v1645
        %v2114 = vpack.c.b16 %v1652, %v1646
        %v2115 = vpack.c.b16 %v1653, %v1647
        %v2116 = vpack.c.b16 %v1654, %v1648
        %v2117 = vpack.c.b16 %v1661, %v1655
        %v2118 = vpack.c.b16 %v1662, %v1656
        %v2119 = vpack.c.b16 %v1663, %v1657
        %v2120 = vpack.c.b16 %v1664, %v1658
        %v2121 = vpack.c.b16 %v1665, %v1659
        %v2122 = vpack.c.b16 %v1666, %v1660
        %v2123 = vpack.c.b16 %v1673, %v1667
        %v2124 = vpack.c.b16 %v1674, %v1668
        %v2125 = vpack.c.b16 %v1675, %v1669
        %v2126 = vpack.c.b16 %v1676, %v1670
        %v2127 = vpack.c.b16 %v1677, %v1671
        %v2128 = vpack.c.b16 %v1678, %v1672
        %v2129 = vpack.c.b16 %v1685, %v1679
        %v2130 = vpack.c.b16 %v1686, %v1680
        %v2131 = vpack.c.b16 %v1687, %v1681
        %v2132 = vpack.c.b16 %v1688, %v1682
        %v2133 = vpack.c.b16 %v1689, %v1683
        %v2134 = vpack.c.b16 %v1690, %v1684
        %v2135 = vpack.c.b16 %v1697, %v1691
        %v2136 = vpack.c.b16 %v1698, %v1692
        %v2137 = vpack.c.b16 %v1699, %v1693
        %v2138 = vpack.c.b16 %v1700, %v1694
        %v2139 = vpack.c.b16 %v1701, %v1695
        %v2140 = vpack.c.b16 %v1702, %v1696
        %v2141 = vpack.c.b16 %v1709, %v1703
        %v2142 = vpack.c.b16 %v1710, %v1704
        %v2143 = vpack.c.b16 %v1711, %v1705
        %v2144 = vpack.c.b16 %v1712, %v1706
        %v2145 = vpack.c.b16 %v1713, %v1707
        %v2146 = vpack.c.b16 %v1714, %v1708
        %v2147 = vpack.c.b16 %v1721, %v1715
        %v2148 = vpack.c.b16 %v1722, %v1716
        %v2149 = vpack.c.b16 %v1723, %v1717
        %v2150 = vpack.c.b16 %v1724, %v1718
        %v2151 = vpack.c.b16 %v1725, %v1719
        %v2152 = vpack.c.b16 %v1726, %v1720
        %v2153 = vpack.c.b16 %v1733, %v1727
        %v2154 = vpack.c.b16 %v1734, %v1728
        %v2155 = vpack.c.b16 %v1735, %v1729
        %v2156 = vpack.c.b16 %v1736, %v1730
        %v2157 = vpack.c.b16 %v1737, %v1731
        %v2158 = vpack.c.b16 %v1738, %v1732
        %v2159 = vpack.c.b16 %v1745, %v1739
        %v2160 = vpack.c.b16 %v1746, %v1740
        %v2161 = vpack.c.b16 %v1747, %v1741
        %v2162 = vpack.c.b16 %v1748, %v1742
        %v2163 = vpack.c.b16 %v1749, %v1743
        %v2164 = vpack.c.b16 %v1750, %v1744
        %v2165 = vpack.c.b16 %v1757, %v1751
        %v2166 = vpack.c.b16 %v1758, %v1752
        %v2167 = vpack.c.b16 %v1759, %v1753
        %v2168 = vpack.c.b16 %v1760, %v1754
        %v2169 = vpack.c.b16 %v1761, %v1755
        %v2170 = vpack.c.b16 %v1762, %v1756
        %v2171 = vpack.c.b16 %v1769, %v1763
        %v2172 = vpack.c.b16 %v1770, %v1764
        %v2173 = vpack.c.b16 %v1771, %v1765
        %v2174 = vpack.c.b16 %v1772, %v1766
        %v2175 = vpack.c.b16 %v1773, %v1767
        %v2176 = vpack.c.b16 %v1774, %v1768
        %v2177 = vpack.c.b16 %v1781, %v1775
        %v2178 = vpack.c.b16 %v1782, %v1776
        %v2179 = vpack.c.b16 %v1783, %v1777
        %v2180 = vpack.c.b16 %v1784, %v1778
        %v2181 = vpack.c.b16 %v1785, %v1779
        %v2182 = vpack.c.b16 %v1786, %v1780
        %v2183 = vpack.c.b16 %v1793, %v1787
        %v2184 = vpack.c.b16 %v1794, %v1788
        %v2185 = vpack.c.b16 %v1795, %v1789
        %v2186 = vpack.c.b16 %v1796, %v1790
        %v2187 = vpack.c.b16 %v1797, %v1791
        %v2188 = vpack.c.b16 %v1798, %v1792
        %v2189 = vpack.c.b16 %v1805, %v1799
        %v2190 = vpack.c.b16 %v1806, %v1800
        %v2191 = vpack.c.b16 %v1807, %v1801
        %v2192 = vpack.c.b16 %v1808, %v1802
        %v2193 = vpack.c.b16 %v1809, %v1803
        %v2194 = vpack.c.b16 %v1810, %v1804
        %2579 = vmatpush.bf16.msra.mxu0 %v1853
        %2580 = vmatpush.bf16.msra.mxu0 %v1847
        %2581 = vmatpush.bf16.msra.mxu0 %v1841
        %2582 = vmatpush.bf16.msra.mxu0 %v1835
        %2583 = vmatpush.bf16.msra.mxu0 %v1829
        %2584 = vmatpush.bf16.msra.mxu0 %v1823
        %2585 = vmatpush.bf16.msra.mxu0 %v1817
        %2586 = vmatpush.bf16.msra.mxu0 %v1811
        %2587 = vmatmul.bf16.gmra.mxu0 %v643
        %v2588 = vpop.f32.mrf.mxu0
        %v2589 = vadd.f32 0.0, %v2588
        %v2590 = vpop.f32.mrf.mxu0
        %v2591 = vadd.f32 0.0, %v2590
        %2592 = vdwg.mxu0
        %2593 = vmatpush.bf16.msra.mxu0 %v1901
        %2594 = vmatpush.bf16.msra.mxu0 %v1895
        %2595 = vmatpush.bf16.msra.mxu0 %v1889
        %2596 = vmatpush.bf16.msra.mxu0 %v1883
        %2597 = vmatpush.bf16.msra.mxu0 %v1877
        %2598 = vmatpush.bf16.msra.mxu0 %v1871
        %2599 = vmatpush.bf16.msra.mxu0 %v1865
        %2600 = vmatpush.bf16.msra.mxu0 %v1859
        %2601 = vmatmul.bf16.gmra.mxu0 %v644
        %v2602 = vpop.f32.mrf.mxu0
        %v2603 = vadd.f32 %v2589, %v2602
        %v2604 = vpop.f32.mrf.mxu0
        %v2605 = vadd.f32 %v2591, %v2604
        %2606 = vdwg.mxu0
        %2607 = vmatpush.bf16.msra.mxu0 %v1949
        %2608 = vmatpush.bf16.msra.mxu0 %v1943
        %2609 = vmatpush.bf16.msra.mxu0 %v1937
        %2610 = vmatpush.bf16.msra.mxu0 %v1931
        %2611 = vmatpush.bf16.msra.mxu0 %v1925
        %2612 = vmatpush.bf16.msra.mxu0 %v1919
        %2613 = vmatpush.bf16.msra.mxu0 %v1913
        %2614 = vmatpush.bf16.msra.mxu0 %v1907
        %2615 = vmatmul.bf16.gmra.mxu0 %v645
        %v2616 = vpop.f32.mrf.mxu0
        %v2617 = vadd.f32 %v2603, %v2616
        %v2618 = vpop.f32.mrf.mxu0
        %v2619 = vadd.f32 %v2605, %v2618
        %2620 = vdwg.mxu0
        %2621 = vmatpush.bf16.msra.mxu0 %v1997
        %2622 = vmatpush.bf16.msra.mxu0 %v1991
        %2623 = vmatpush.bf16.msra.mxu0 %v1985
        %2624 = vmatpush.bf16.msra.mxu0 %v1979
        %2625 = vmatpush.bf16.msra.mxu0 %v1973
        %2626 = vmatpush.bf16.msra.mxu0 %v1967
        %2627 = vmatpush.bf16.msra.mxu0 %v1961
        %2628 = vmatpush.bf16.msra.mxu0 %v1955
        %2629 = vmatmul.bf16.gmra.mxu0 %v646
        %v2630 = vpop.f32.mrf.mxu0
        %v2631 = vadd.f32 %v2617, %v2630
        %v2632 = vpop.f32.mrf.mxu0
        %v2633 = vadd.f32 %v2619, %v2632
        %2634 = vdwg.mxu0
        %2635 = vmatpush.bf16.msra.mxu0 %v2045
        %2636 = vmatpush.bf16.msra.mxu0 %v2039
        %2637 = vmatpush.bf16.msra.mxu0 %v2033
        %2638 = vmatpush.bf16.msra.mxu0 %v2027
        %2639 = vmatpush.bf16.msra.mxu0 %v2021
        %2640 = vmatpush.bf16.msra.mxu0 %v2015
        %2641 = vmatpush.bf16.msra.mxu0 %v2009
        %2642 = vmatpush.bf16.msra.mxu0 %v2003
        %2643 = vmatmul.bf16.gmra.mxu0 %v647
        %v2644 = vpop.f32.mrf.mxu0
        %v2645 = vadd.f32 %v2631, %v2644
        %v2646 = vpop.f32.mrf.mxu0
        %v2647 = vadd.f32 %v2633, %v2646
        %2648 = vdwg.mxu0
        %2649 = vmatpush.bf16.msra.mxu0 %v2093
        %2650 = vmatpush.bf16.msra.mxu0 %v2087
        %2651 = vmatpush.bf16.msra.mxu0 %v2081
        %2652 = vmatpush.bf16.msra.mxu0 %v2075
        %2653 = vmatpush.bf16.msra.mxu0 %v2069
        %2654 = vmatpush.bf16.msra.mxu0 %v2063
        %2655 = vmatpush.bf16.msra.mxu0 %v2057
        %2656 = vmatpush.bf16.msra.mxu0 %v2051
        %2657 = vmatmul.bf16.gmra.mxu0 %v648
        %v2658 = vpop.f32.mrf.mxu0
        %v2659 = vadd.f32 %v2645, %v2658
        %v2660 = vpop.f32.mrf.mxu0
        %v2661 = vadd.f32 %v2647, %v2660
        %2662 = vdwg.mxu0
        %2663 = vmatpush.bf16.msra.mxu0 %v2141
        %2664 = vmatpush.bf16.msra.mxu0 %v2135
        %2665 = vmatpush.bf16.msra.mxu0 %v2129
        %2666 = vmatpush.bf16.msra.mxu0 %v2123
        %2667 = vmatpush.bf16.msra.mxu0 %v2117
        %2668 = vmatpush.bf16.msra.mxu0 %v2111
        %2669 = vmatpush.bf16.msra.mxu0 %v2105
        %2670 = vmatpush.bf16.msra.mxu0 %v2099
        %2671 = vmatmul.bf16.gmra.mxu0 %v649
        %v2672 = vpop.f32.mrf.mxu0
        %v2673 = vadd.f32 %v2659, %v2672
        %v2674 = vpop.f32.mrf.mxu0
        %v2675 = vadd.f32 %v2661, %v2674
        %2676 = vdwg.mxu0
        %2677 = vmatpush.bf16.msra.mxu0 %v2189
        %2678 = vmatpush.bf16.msra.mxu0 %v2183
        %2679 = vmatpush.bf16.msra.mxu0 %v2177
        %2680 = vmatpush.bf16.msra.mxu0 %v2171
        %2681 = vmatpush.bf16.msra.mxu0 %v2165
        %2682 = vmatpush.bf16.msra.mxu0 %v2159
        %2683 = vmatpush.bf16.msra.mxu0 %v2153
        %2684 = vmatpush.bf16.msra.mxu0 %v2147
        %2685 = vmatmul.bf16.gmra.mxu0 %v650
        %v2686 = vpop.f32.mrf.mxu0
        %v2687 = vadd.f32 %v2673, %v2686
        %v2688 = vpop.f32.mrf.mxu0
        %v2689 = vadd.f32 %v2675, %v2688
        %2690 = vdwg.mxu0
        %2691 = vmatpush.bf16.msra.mxu0 %v1854
        %2692 = vmatpush.bf16.msra.mxu0 %v1848
        %2693 = vmatpush.bf16.msra.mxu0 %v1842
        %2694 = vmatpush.bf16.msra.mxu0 %v1836
        %2695 = vmatpush.bf16.msra.mxu0 %v1830
        %2696 = vmatpush.bf16.msra.mxu0 %v1824
        %2697 = vmatpush.bf16.msra.mxu0 %v1818
        %2698 = vmatpush.bf16.msra.mxu0 %v1812
        %2699 = vmatmul.bf16.gmra.mxu0 %v643
        %v2700 = vpop.f32.mrf.mxu0
        %v2701 = vadd.f32 0.0, %v2700
        %v2702 = vpop.f32.mrf.mxu0
        %v2703 = vadd.f32 0.0, %v2702
        %2704 = vdwg.mxu0
        %2705 = vmatpush.bf16.msra.mxu0 %v1902
        %2706 = vmatpush.bf16.msra.mxu0 %v1896
        %2707 = vmatpush.bf16.msra.mxu0 %v1890
        %2708 = vmatpush.bf16.msra.mxu0 %v1884
        %2709 = vmatpush.bf16.msra.mxu0 %v1878
        %2710 = vmatpush.bf16.msra.mxu0 %v1872
        %2711 = vmatpush.bf16.msra.mxu0 %v1866
        %2712 = vmatpush.bf16.msra.mxu0 %v1860
        %2713 = vmatmul.bf16.gmra.mxu0 %v644
        %v2714 = vpop.f32.mrf.mxu0
        %v2715 = vadd.f32 %v2701, %v2714
        %v2716 = vpop.f32.mrf.mxu0
        %v2717 = vadd.f32 %v2703, %v2716
        %2718 = vdwg.mxu0
        %2719 = vmatpush.bf16.msra.mxu0 %v1950
        %2720 = vmatpush.bf16.msra.mxu0 %v1944
        %2721 = vmatpush.bf16.msra.mxu0 %v1938
        %2722 = vmatpush.bf16.msra.mxu0 %v1932
        %2723 = vmatpush.bf16.msra.mxu0 %v1926
        %2724 = vmatpush.bf16.msra.mxu0 %v1920
        %2725 = vmatpush.bf16.msra.mxu0 %v1914
        %2726 = vmatpush.bf16.msra.mxu0 %v1908
        %2727 = vmatmul.bf16.gmra.mxu0 %v645
        %v2728 = vpop.f32.mrf.mxu0
        %v2729 = vadd.f32 %v2715, %v2728
        %v2730 = vpop.f32.mrf.mxu0
        %v2731 = vadd.f32 %v2717, %v2730
        %2732 = vdwg.mxu0
        %2733 = vmatpush.bf16.msra.mxu0 %v1998
        %2734 = vmatpush.bf16.msra.mxu0 %v1992
        %2735 = vmatpush.bf16.msra.mxu0 %v1986
        %2736 = vmatpush.bf16.msra.mxu0 %v1980
        %2737 = vmatpush.bf16.msra.mxu0 %v1974
        %2738 = vmatpush.bf16.msra.mxu0 %v1968
        %2739 = vmatpush.bf16.msra.mxu0 %v1962
        %2740 = vmatpush.bf16.msra.mxu0 %v1956
        %2741 = vmatmul.bf16.gmra.mxu0 %v646
        %v2742 = vpop.f32.mrf.mxu0
        %v2743 = vadd.f32 %v2729, %v2742
        %v2744 = vpop.f32.mrf.mxu0
        %v2745 = vadd.f32 %v2731, %v2744
        %2746 = vdwg.mxu0
        %2747 = vmatpush.bf16.msra.mxu0 %v2046
        %2748 = vmatpush.bf16.msra.mxu0 %v2040
        %2749 = vmatpush.bf16.msra.mxu0 %v2034
        %2750 = vmatpush.bf16.msra.mxu0 %v2028
        %2751 = vmatpush.bf16.msra.mxu0 %v2022
        %2752 = vmatpush.bf16.msra.mxu0 %v2016
        %2753 = vmatpush.bf16.msra.mxu0 %v2010
        %2754 = vmatpush.bf16.msra.mxu0 %v2004
        %2755 = vmatmul.bf16.gmra.mxu0 %v647
        %v2756 = vpop.f32.mrf.mxu0
        %v2757 = vadd.f32 %v2743, %v2756
        %v2758 = vpop.f32.mrf.mxu0
        %v2759 = vadd.f32 %v2745, %v2758
        %2760 = vdwg.mxu0
        %2761 = vmatpush.bf16.msra.mxu0 %v2094
        %2762 = vmatpush.bf16.msra.mxu0 %v2088
        %2763 = vmatpush.bf16.msra.mxu0 %v2082
        %2764 = vmatpush.bf16.msra.mxu0 %v2076
        %2765 = vmatpush.bf16.msra.mxu0 %v2070
        %2766 = vmatpush.bf16.msra.mxu0 %v2064
        %2767 = vmatpush.bf16.msra.mxu0 %v2058
        %2768 = vmatpush.bf16.msra.mxu0 %v2052
        %2769 = vmatmul.bf16.gmra.mxu0 %v648
        %v2770 = vpop.f32.mrf.mxu0
        %v2771 = vadd.f32 %v2757, %v2770
        %v2772 = vpop.f32.mrf.mxu0
        %v2773 = vadd.f32 %v2759, %v2772
        %2774 = vdwg.mxu0
        %2775 = vmatpush.bf16.msra.mxu0 %v2142
        %2776 = vmatpush.bf16.msra.mxu0 %v2136
        %2777 = vmatpush.bf16.msra.mxu0 %v2130
        %2778 = vmatpush.bf16.msra.mxu0 %v2124
        %2779 = vmatpush.bf16.msra.mxu0 %v2118
        %2780 = vmatpush.bf16.msra.mxu0 %v2112
        %2781 = vmatpush.bf16.msra.mxu0 %v2106
        %2782 = vmatpush.bf16.msra.mxu0 %v2100
        %2783 = vmatmul.bf16.gmra.mxu0 %v649
        %v2784 = vpop.f32.mrf.mxu0
        %v2785 = vadd.f32 %v2771, %v2784
        %v2786 = vpop.f32.mrf.mxu0
        %v2787 = vadd.f32 %v2773, %v2786
        %2788 = vdwg.mxu0
        %2789 = vmatpush.bf16.msra.mxu0 %v2190
        %2790 = vmatpush.bf16.msra.mxu0 %v2184
        %2791 = vmatpush.bf16.msra.mxu0 %v2178
        %2792 = vmatpush.bf16.msra.mxu0 %v2172
        %2793 = vmatpush.bf16.msra.mxu0 %v2166
        %2794 = vmatpush.bf16.msra.mxu0 %v2160
        %2795 = vmatpush.bf16.msra.mxu0 %v2154
        %2796 = vmatpush.bf16.msra.mxu0 %v2148
        %2797 = vmatmul.bf16.gmra.mxu0 %v650
        %v2798 = vpop.f32.mrf.mxu0
        %v2799 = vadd.f32 %v2785, %v2798
        %v2800 = vpop.f32.mrf.mxu0
        %v2801 = vadd.f32 %v2787, %v2800
        %2802 = vdwg.mxu0
        %2803 = vmatpush.bf16.msra.mxu0 %v1855
        %2804 = vmatpush.bf16.msra.mxu0 %v1849
        %2805 = vmatpush.bf16.msra.mxu0 %v1843
        %2806 = vmatpush.bf16.msra.mxu0 %v1837
        %2807 = vmatpush.bf16.msra.mxu0 %v1831
        %2808 = vmatpush.bf16.msra.mxu0 %v1825
        %2809 = vmatpush.bf16.msra.mxu0 %v1819
        %2810 = vmatpush.bf16.msra.mxu0 %v1813
        %2811 = vmatmul.bf16.gmra.mxu0 %v643
        %v2812 = vpop.f32.mrf.mxu0
        %v2813 = vadd.f32 0.0, %v2812
        %v2814 = vpop.f32.mrf.mxu0
        %v2815 = vadd.f32 0.0, %v2814
        %2816 = vdwg.mxu0
        %2817 = vmatpush.bf16.msra.mxu0 %v1903
        %2818 = vmatpush.bf16.msra.mxu0 %v1897
        %2819 = vmatpush.bf16.msra.mxu0 %v1891
        %2820 = vmatpush.bf16.msra.mxu0 %v1885
        %2821 = vmatpush.bf16.msra.mxu0 %v1879
        %2822 = vmatpush.bf16.msra.mxu0 %v1873
        %2823 = vmatpush.bf16.msra.mxu0 %v1867
        %2824 = vmatpush.bf16.msra.mxu0 %v1861
        %2825 = vmatmul.bf16.gmra.mxu0 %v644
        %v2826 = vpop.f32.mrf.mxu0
        %v2827 = vadd.f32 %v2813, %v2826
        %v2828 = vpop.f32.mrf.mxu0
        %v2829 = vadd.f32 %v2815, %v2828
        %2830 = vdwg.mxu0
        %2831 = vmatpush.bf16.msra.mxu0 %v1951
        %2832 = vmatpush.bf16.msra.mxu0 %v1945
        %2833 = vmatpush.bf16.msra.mxu0 %v1939
        %2834 = vmatpush.bf16.msra.mxu0 %v1933
        %2835 = vmatpush.bf16.msra.mxu0 %v1927
        %2836 = vmatpush.bf16.msra.mxu0 %v1921
        %2837 = vmatpush.bf16.msra.mxu0 %v1915
        %2838 = vmatpush.bf16.msra.mxu0 %v1909
        %2839 = vmatmul.bf16.gmra.mxu0 %v645
        %v2840 = vpop.f32.mrf.mxu0
        %v2841 = vadd.f32 %v2827, %v2840
        %v2842 = vpop.f32.mrf.mxu0
        %v2843 = vadd.f32 %v2829, %v2842
        %2844 = vdwg.mxu0
        %2845 = vmatpush.bf16.msra.mxu0 %v1999
        %2846 = vmatpush.bf16.msra.mxu0 %v1993
        %2847 = vmatpush.bf16.msra.mxu0 %v1987
        %2848 = vmatpush.bf16.msra.mxu0 %v1981
        %2849 = vmatpush.bf16.msra.mxu0 %v1975
        %2850 = vmatpush.bf16.msra.mxu0 %v1969
        %2851 = vmatpush.bf16.msra.mxu0 %v1963
        %2852 = vmatpush.bf16.msra.mxu0 %v1957
        %2853 = vmatmul.bf16.gmra.mxu0 %v646
        %v2854 = vpop.f32.mrf.mxu0
        %v2855 = vadd.f32 %v2841, %v2854
        %v2856 = vpop.f32.mrf.mxu0
        %v2857 = vadd.f32 %v2843, %v2856
        %2858 = vdwg.mxu0
        %2859 = vmatpush.bf16.msra.mxu0 %v2047
        %2860 = vmatpush.bf16.msra.mxu0 %v2041
        %2861 = vmatpush.bf16.msra.mxu0 %v2035
        %2862 = vmatpush.bf16.msra.mxu0 %v2029
        %2863 = vmatpush.bf16.msra.mxu0 %v2023
        %2864 = vmatpush.bf16.msra.mxu0 %v2017
        %2865 = vmatpush.bf16.msra.mxu0 %v2011
        %2866 = vmatpush.bf16.msra.mxu0 %v2005
        %2867 = vmatmul.bf16.gmra.mxu0 %v647
        %v2868 = vpop.f32.mrf.mxu0
        %v2869 = vadd.f32 %v2855, %v2868
        %v2870 = vpop.f32.mrf.mxu0
        %v2871 = vadd.f32 %v2857, %v2870
        %2872 = vdwg.mxu0
        %2873 = vmatpush.bf16.msra.mxu0 %v2095
        %2874 = vmatpush.bf16.msra.mxu0 %v2089
        %2875 = vmatpush.bf16.msra.mxu0 %v2083
        %2876 = vmatpush.bf16.msra.mxu0 %v2077
        %2877 = vmatpush.bf16.msra.mxu0 %v2071
        %2878 = vmatpush.bf16.msra.mxu0 %v2065
        %2879 = vmatpush.bf16.msra.mxu0 %v2059
        %2880 = vmatpush.bf16.msra.mxu0 %v2053
        %2881 = vmatmul.bf16.gmra.mxu0 %v648
        %v2882 = vpop.f32.mrf.mxu0
        %v2883 = vadd.f32 %v2869, %v2882
        %v2884 = vpop.f32.mrf.mxu0
        %v2885 = vadd.f32 %v2871, %v2884
        %2886 = vdwg.mxu0
        %2887 = vmatpush.bf16.msra.mxu0 %v2143
        %2888 = vmatpush.bf16.msra.mxu0 %v2137
        %2889 = vmatpush.bf16.msra.mxu0 %v2131
        %2890 = vmatpush.bf16.msra.mxu0 %v2125
        %2891 = vmatpush.bf16.msra.mxu0 %v2119
        %2892 = vmatpush.bf16.msra.mxu0 %v2113
        %2893 = vmatpush.bf16.msra.mxu0 %v2107
        %2894 = vmatpush.bf16.msra.mxu0 %v2101
        %2895 = vmatmul.bf16.gmra.mxu0 %v649
        %v2896 = vpop.f32.mrf.mxu0
        %v2897 = vadd.f32 %v2883, %v2896
        %v2898 = vpop.f32.mrf.mxu0
        %v2899 = vadd.f32 %v2885, %v2898
        %2900 = vdwg.mxu0
        %2901 = vmatpush.bf16.msra.mxu0 %v2191
        %2902 = vmatpush.bf16.msra.mxu0 %v2185
        %2903 = vmatpush.bf16.msra.mxu0 %v2179
        %2904 = vmatpush.bf16.msra.mxu0 %v2173
        %2905 = vmatpush.bf16.msra.mxu0 %v2167
        %2906 = vmatpush.bf16.msra.mxu0 %v2161
        %2907 = vmatpush.bf16.msra.mxu0 %v2155
        %2908 = vmatpush.bf16.msra.mxu0 %v2149
        %2909 = vmatmul.bf16.gmra.mxu0 %v650
        %v2910 = vpop.f32.mrf.mxu0
        %v2911 = vadd.f32 %v2897, %v2910
        %v2912 = vpop.f32.mrf.mxu0
        %v2913 = vadd.f32 %v2899, %v2912
        %2914 = vdwg.mxu0
        %2915 = vmatpush.bf16.msra.mxu0 %v1856
        %2916 = vmatpush.bf16.msra.mxu0 %v1850
        %2917 = vmatpush.bf16.msra.mxu0 %v1844
        %2918 = vmatpush.bf16.msra.mxu0 %v1838
        %2919 = vmatpush.bf16.msra.mxu0 %v1832
        %2920 = vmatpush.bf16.msra.mxu0 %v1826
        %2921 = vmatpush.bf16.msra.mxu0 %v1820
        %2922 = vmatpush.bf16.msra.mxu0 %v1814
        %2923 = vmatmul.bf16.gmra.mxu0 %v643
        %v2924 = vpop.f32.mrf.mxu0
        %v2925 = vadd.f32 0.0, %v2924
        %v2926 = vpop.f32.mrf.mxu0
        %v2927 = vadd.f32 0.0, %v2926
        %2928 = vdwg.mxu0
        %2929 = vmatpush.bf16.msra.mxu0 %v1904
        %2930 = vmatpush.bf16.msra.mxu0 %v1898
        %2931 = vmatpush.bf16.msra.mxu0 %v1892
        %2932 = vmatpush.bf16.msra.mxu0 %v1886
        %2933 = vmatpush.bf16.msra.mxu0 %v1880
        %2934 = vmatpush.bf16.msra.mxu0 %v1874
        %2935 = vmatpush.bf16.msra.mxu0 %v1868
        %2936 = vmatpush.bf16.msra.mxu0 %v1862
        %2937 = vmatmul.bf16.gmra.mxu0 %v644
        %v2938 = vpop.f32.mrf.mxu0
        %v2939 = vadd.f32 %v2925, %v2938
        %v2940 = vpop.f32.mrf.mxu0
        %v2941 = vadd.f32 %v2927, %v2940
        %2942 = vdwg.mxu0
        %2943 = vmatpush.bf16.msra.mxu0 %v1952
        %2944 = vmatpush.bf16.msra.mxu0 %v1946
        %2945 = vmatpush.bf16.msra.mxu0 %v1940
        %2946 = vmatpush.bf16.msra.mxu0 %v1934
        %2947 = vmatpush.bf16.msra.mxu0 %v1928
        %2948 = vmatpush.bf16.msra.mxu0 %v1922
        %2949 = vmatpush.bf16.msra.mxu0 %v1916
        %2950 = vmatpush.bf16.msra.mxu0 %v1910
        %2951 = vmatmul.bf16.gmra.mxu0 %v645
        %v2952 = vpop.f32.mrf.mxu0
        %v2953 = vadd.f32 %v2939, %v2952
        %v2954 = vpop.f32.mrf.mxu0
        %v2955 = vadd.f32 %v2941, %v2954
        %2956 = vdwg.mxu0
        %2957 = vmatpush.bf16.msra.mxu0 %v2000
        %2958 = vmatpush.bf16.msra.mxu0 %v1994
        %2959 = vmatpush.bf16.msra.mxu0 %v1988
        %2960 = vmatpush.bf16.msra.mxu0 %v1982
        %2961 = vmatpush.bf16.msra.mxu0 %v1976
        %2962 = vmatpush.bf16.msra.mxu0 %v1970
        %2963 = vmatpush.bf16.msra.mxu0 %v1964
        %2964 = vmatpush.bf16.msra.mxu0 %v1958
        %2965 = vmatmul.bf16.gmra.mxu0 %v646
        %v2966 = vpop.f32.mrf.mxu0
        %v2967 = vadd.f32 %v2953, %v2966
        %v2968 = vpop.f32.mrf.mxu0
        %v2969 = vadd.f32 %v2955, %v2968
        %2970 = vdwg.mxu0
        %2971 = vmatpush.bf16.msra.mxu0 %v2048
        %2972 = vmatpush.bf16.msra.mxu0 %v2042
        %2973 = vmatpush.bf16.msra.mxu0 %v2036
        %2974 = vmatpush.bf16.msra.mxu0 %v2030
        %2975 = vmatpush.bf16.msra.mxu0 %v2024
        %2976 = vmatpush.bf16.msra.mxu0 %v2018
        %2977 = vmatpush.bf16.msra.mxu0 %v2012
        %2978 = vmatpush.bf16.msra.mxu0 %v2006
        %2979 = vmatmul.bf16.gmra.mxu0 %v647
        %v2980 = vpop.f32.mrf.mxu0
        %v2981 = vadd.f32 %v2967, %v2980
        %v2982 = vpop.f32.mrf.mxu0
        %v2983 = vadd.f32 %v2969, %v2982
        %2984 = vdwg.mxu0
        %2985 = vmatpush.bf16.msra.mxu0 %v2096
        %2986 = vmatpush.bf16.msra.mxu0 %v2090
        %2987 = vmatpush.bf16.msra.mxu0 %v2084
        %2988 = vmatpush.bf16.msra.mxu0 %v2078
        %2989 = vmatpush.bf16.msra.mxu0 %v2072
        %2990 = vmatpush.bf16.msra.mxu0 %v2066
        %2991 = vmatpush.bf16.msra.mxu0 %v2060
        %2992 = vmatpush.bf16.msra.mxu0 %v2054
        %2993 = vmatmul.bf16.gmra.mxu0 %v648
        %v2994 = vpop.f32.mrf.mxu0
        %v2995 = vadd.f32 %v2981, %v2994
        %v2996 = vpop.f32.mrf.mxu0
        %v2997 = vadd.f32 %v2983, %v2996
        %2998 = vdwg.mxu0
        %2999 = vmatpush.bf16.msra.mxu0 %v2144
        %3000 = vmatpush.bf16.msra.mxu0 %v2138
        %3001 = vmatpush.bf16.msra.mxu0 %v2132
        %3002 = vmatpush.bf16.msra.mxu0 %v2126
        %3003 = vmatpush.bf16.msra.mxu0 %v2120
        %3004 = vmatpush.bf16.msra.mxu0 %v2114
        %3005 = vmatpush.bf16.msra.mxu0 %v2108
        %3006 = vmatpush.bf16.msra.mxu0 %v2102
        %3007 = vmatmul.bf16.gmra.mxu0 %v649
        %v3008 = vpop.f32.mrf.mxu0
        %v3009 = vadd.f32 %v2995, %v3008
        %v3010 = vpop.f32.mrf.mxu0
        %v3011 = vadd.f32 %v2997, %v3010
        %3012 = vdwg.mxu0
        %3013 = vmatpush.bf16.msra.mxu0 %v2192
        %3014 = vmatpush.bf16.msra.mxu0 %v2186
        %3015 = vmatpush.bf16.msra.mxu0 %v2180
        %3016 = vmatpush.bf16.msra.mxu0 %v2174
        %3017 = vmatpush.bf16.msra.mxu0 %v2168
        %3018 = vmatpush.bf16.msra.mxu0 %v2162
        %3019 = vmatpush.bf16.msra.mxu0 %v2156
        %3020 = vmatpush.bf16.msra.mxu0 %v2150
        %3021 = vmatmul.bf16.gmra.mxu0 %v650
        %v3022 = vpop.f32.mrf.mxu0
        %v3023 = vadd.f32 %v3009, %v3022
        %v3024 = vpop.f32.mrf.mxu0
        %v3025 = vadd.f32 %v3011, %v3024
        %3026 = vdwg.mxu0
        %3027 = vmatpush.bf16.msra.mxu0 %v1857
        %3028 = vmatpush.bf16.msra.mxu0 %v1851
        %3029 = vmatpush.bf16.msra.mxu0 %v1845
        %3030 = vmatpush.bf16.msra.mxu0 %v1839
        %3031 = vmatpush.bf16.msra.mxu0 %v1833
        %3032 = vmatpush.bf16.msra.mxu0 %v1827
        %3033 = vmatpush.bf16.msra.mxu0 %v1821
        %3034 = vmatpush.bf16.msra.mxu0 %v1815
        %3035 = vmatmul.bf16.gmra.mxu0 %v643
        %v3036 = vpop.f32.mrf.mxu0
        %v3037 = vadd.f32 0.0, %v3036
        %v3038 = vpop.f32.mrf.mxu0
        %v3039 = vadd.f32 0.0, %v3038
        %3040 = vdwg.mxu0
        %3041 = vmatpush.bf16.msra.mxu0 %v1905
        %3042 = vmatpush.bf16.msra.mxu0 %v1899
        %3043 = vmatpush.bf16.msra.mxu0 %v1893
        %3044 = vmatpush.bf16.msra.mxu0 %v1887
        %3045 = vmatpush.bf16.msra.mxu0 %v1881
        %3046 = vmatpush.bf16.msra.mxu0 %v1875
        %3047 = vmatpush.bf16.msra.mxu0 %v1869
        %3048 = vmatpush.bf16.msra.mxu0 %v1863
        %3049 = vmatmul.bf16.gmra.mxu0 %v644
        %v3050 = vpop.f32.mrf.mxu0
        %v3051 = vadd.f32 %v3037, %v3050
        %v3052 = vpop.f32.mrf.mxu0
        %v3053 = vadd.f32 %v3039, %v3052
        %3054 = vdwg.mxu0
        %3055 = vmatpush.bf16.msra.mxu0 %v1953
        %3056 = vmatpush.bf16.msra.mxu0 %v1947
        %3057 = vmatpush.bf16.msra.mxu0 %v1941
        %3058 = vmatpush.bf16.msra.mxu0 %v1935
        %3059 = vmatpush.bf16.msra.mxu0 %v1929
        %3060 = vmatpush.bf16.msra.mxu0 %v1923
        %3061 = vmatpush.bf16.msra.mxu0 %v1917
        %3062 = vmatpush.bf16.msra.mxu0 %v1911
        %3063 = vmatmul.bf16.gmra.mxu0 %v645
        %v3064 = vpop.f32.mrf.mxu0
        %v3065 = vadd.f32 %v3051, %v3064
        %v3066 = vpop.f32.mrf.mxu0
        %v3067 = vadd.f32 %v3053, %v3066
        %3068 = vdwg.mxu0
        %3069 = vmatpush.bf16.msra.mxu0 %v2001
        %3070 = vmatpush.bf16.msra.mxu0 %v1995
        %3071 = vmatpush.bf16.msra.mxu0 %v1989
        %3072 = vmatpush.bf16.msra.mxu0 %v1983
        %3073 = vmatpush.bf16.msra.mxu0 %v1977
        %3074 = vmatpush.bf16.msra.mxu0 %v1971
        %3075 = vmatpush.bf16.msra.mxu0 %v1965
        %3076 = vmatpush.bf16.msra.mxu0 %v1959
        %3077 = vmatmul.bf16.gmra.mxu0 %v646
        %v3078 = vpop.f32.mrf.mxu0
        %v3079 = vadd.f32 %v3065, %v3078
        %v3080 = vpop.f32.mrf.mxu0
        %v3081 = vadd.f32 %v3067, %v3080
        %3082 = vdwg.mxu0
        %3083 = vmatpush.bf16.msra.mxu0 %v2049
        %3084 = vmatpush.bf16.msra.mxu0 %v2043
        %3085 = vmatpush.bf16.msra.mxu0 %v2037
        %3086 = vmatpush.bf16.msra.mxu0 %v2031
        %3087 = vmatpush.bf16.msra.mxu0 %v2025
        %3088 = vmatpush.bf16.msra.mxu0 %v2019
        %3089 = vmatpush.bf16.msra.mxu0 %v2013
        %3090 = vmatpush.bf16.msra.mxu0 %v2007
        %3091 = vmatmul.bf16.gmra.mxu0 %v647
        %v3092 = vpop.f32.mrf.mxu0
        %v3093 = vadd.f32 %v3079, %v3092
        %v3094 = vpop.f32.mrf.mxu0
        %v3095 = vadd.f32 %v3081, %v3094
        %3096 = vdwg.mxu0
        %3097 = vmatpush.bf16.msra.mxu0 %v2097
        %3098 = vmatpush.bf16.msra.mxu0 %v2091
        %3099 = vmatpush.bf16.msra.mxu0 %v2085
        %3100 = vmatpush.bf16.msra.mxu0 %v2079
        %3101 = vmatpush.bf16.msra.mxu0 %v2073
        %3102 = vmatpush.bf16.msra.mxu0 %v2067
        %3103 = vmatpush.bf16.msra.mxu0 %v2061
        %3104 = vmatpush.bf16.msra.mxu0 %v2055
        %3105 = vmatmul.bf16.gmra.mxu0 %v648
        %v3106 = vpop.f32.mrf.mxu0
        %v3107 = vadd.f32 %v3093, %v3106
        %v3108 = vpop.f32.mrf.mxu0
        %v3109 = vadd.f32 %v3095, %v3108
        %3110 = vdwg.mxu0
        %3111 = vmatpush.bf16.msra.mxu0 %v2145
        %3112 = vmatpush.bf16.msra.mxu0 %v2139
        %3113 = vmatpush.bf16.msra.mxu0 %v2133
        %3114 = vmatpush.bf16.msra.mxu0 %v2127
        %3115 = vmatpush.bf16.msra.mxu0 %v2121
        %3116 = vmatpush.bf16.msra.mxu0 %v2115
        %3117 = vmatpush.bf16.msra.mxu0 %v2109
        %3118 = vmatpush.bf16.msra.mxu0 %v2103
        %3119 = vmatmul.bf16.gmra.mxu0 %v649
        %v3120 = vpop.f32.mrf.mxu0
        %v3121 = vadd.f32 %v3107, %v3120
        %v3122 = vpop.f32.mrf.mxu0
        %v3123 = vadd.f32 %v3109, %v3122
        %3124 = vdwg.mxu0
        %3125 = vmatpush.bf16.msra.mxu0 %v2193
        %3126 = vmatpush.bf16.msra.mxu0 %v2187
        %3127 = vmatpush.bf16.msra.mxu0 %v2181
        %3128 = vmatpush.bf16.msra.mxu0 %v2175
        %3129 = vmatpush.bf16.msra.mxu0 %v2169
        %3130 = vmatpush.bf16.msra.mxu0 %v2163
        %3131 = vmatpush.bf16.msra.mxu0 %v2157
        %3132 = vmatpush.bf16.msra.mxu0 %v2151
        %3133 = vmatmul.bf16.gmra.mxu0 %v650
        %v3134 = vpop.f32.mrf.mxu0
        %v3135 = vadd.f32 %v3121, %v3134
        %v3136 = vpop.f32.mrf.mxu0
        %v3137 = vadd.f32 %v3123, %v3136
        %3138 = vdwg.mxu0
        %3139 = vmatpush.bf16.msra.mxu0 %v1858
        %3140 = vmatpush.bf16.msra.mxu0 %v1852
        %3141 = vmatpush.bf16.msra.mxu0 %v1846
        %3142 = vmatpush.bf16.msra.mxu0 %v1840
        %3143 = vmatpush.bf16.msra.mxu0 %v1834
        %3144 = vmatpush.bf16.msra.mxu0 %v1828
        %3145 = vmatpush.bf16.msra.mxu0 %v1822
        %3146 = vmatpush.bf16.msra.mxu0 %v1816
        %3147 = vmatmul.bf16.gmra.mxu0 %v643
        %v3148 = vpop.f32.mrf.mxu0
        %v3149 = vadd.f32 0.0, %v3148
        %v3150 = vpop.f32.mrf.mxu0
        %v3151 = vadd.f32 0.0, %v3150
        %3152 = vdwg.mxu0
        %3153 = vmatpush.bf16.msra.mxu0 %v1906
        %3154 = vmatpush.bf16.msra.mxu0 %v1900
        %3155 = vmatpush.bf16.msra.mxu0 %v1894
        %3156 = vmatpush.bf16.msra.mxu0 %v1888
        %3157 = vmatpush.bf16.msra.mxu0 %v1882
        %3158 = vmatpush.bf16.msra.mxu0 %v1876
        %3159 = vmatpush.bf16.msra.mxu0 %v1870
        %3160 = vmatpush.bf16.msra.mxu0 %v1864
        %3161 = vmatmul.bf16.gmra.mxu0 %v644
        %v3162 = vpop.f32.mrf.mxu0
        %v3163 = vadd.f32 %v3149, %v3162
        %v3164 = vpop.f32.mrf.mxu0
        %v3165 = vadd.f32 %v3151, %v3164
        %3166 = vdwg.mxu0
        %3167 = vmatpush.bf16.msra.mxu0 %v1954
        %3168 = vmatpush.bf16.msra.mxu0 %v1948
        %3169 = vmatpush.bf16.msra.mxu0 %v1942
        %3170 = vmatpush.bf16.msra.mxu0 %v1936
        %3171 = vmatpush.bf16.msra.mxu0 %v1930
        %3172 = vmatpush.bf16.msra.mxu0 %v1924
        %3173 = vmatpush.bf16.msra.mxu0 %v1918
        %3174 = vmatpush.bf16.msra.mxu0 %v1912
        %3175 = vmatmul.bf16.gmra.mxu0 %v645
        %v3176 = vpop.f32.mrf.mxu0
        %v3177 = vadd.f32 %v3163, %v3176
        %v3178 = vpop.f32.mrf.mxu0
        %v3179 = vadd.f32 %v3165, %v3178
        %3180 = vdwg.mxu0
        %3181 = vmatpush.bf16.msra.mxu0 %v2002
        %3182 = vmatpush.bf16.msra.mxu0 %v1996
        %3183 = vmatpush.bf16.msra.mxu0 %v1990
        %3184 = vmatpush.bf16.msra.mxu0 %v1984
        %3185 = vmatpush.bf16.msra.mxu0 %v1978
        %3186 = vmatpush.bf16.msra.mxu0 %v1972
        %3187 = vmatpush.bf16.msra.mxu0 %v1966
        %3188 = vmatpush.bf16.msra.mxu0 %v1960
        %3189 = vmatmul.bf16.gmra.mxu0 %v646
        %v3190 = vpop.f32.mrf.mxu0
        %v3191 = vadd.f32 %v3177, %v3190
        %v3192 = vpop.f32.mrf.mxu0
        %v3193 = vadd.f32 %v3179, %v3192
        %3194 = vdwg.mxu0
        %3195 = vmatpush.bf16.msra.mxu0 %v2050
        %3196 = vmatpush.bf16.msra.mxu0 %v2044
        %3197 = vmatpush.bf16.msra.mxu0 %v2038
        %3198 = vmatpush.bf16.msra.mxu0 %v2032
        %3199 = vmatpush.bf16.msra.mxu0 %v2026
        %3200 = vmatpush.bf16.msra.mxu0 %v2020
        %3201 = vmatpush.bf16.msra.mxu0 %v2014
        %3202 = vmatpush.bf16.msra.mxu0 %v2008
        %3203 = vmatmul.bf16.gmra.mxu0 %v647
        %v3204 = vpop.f32.mrf.mxu0
        %v3205 = vadd.f32 %v3191, %v3204
        %v3206 = vpop.f32.mrf.mxu0
        %v3207 = vadd.f32 %v3193, %v3206
        %3208 = vdwg.mxu0
        %3209 = vmatpush.bf16.msra.mxu0 %v2098
        %3210 = vmatpush.bf16.msra.mxu0 %v2092
        %3211 = vmatpush.bf16.msra.mxu0 %v2086
        %3212 = vmatpush.bf16.msra.mxu0 %v2080
        %3213 = vmatpush.bf16.msra.mxu0 %v2074
        %3214 = vmatpush.bf16.msra.mxu0 %v2068
        %3215 = vmatpush.bf16.msra.mxu0 %v2062
        %3216 = vmatpush.bf16.msra.mxu0 %v2056
        %3217 = vmatmul.bf16.gmra.mxu0 %v648
        %v3218 = vpop.f32.mrf.mxu0
        %v3219 = vadd.f32 %v3205, %v3218
        %v3220 = vpop.f32.mrf.mxu0
        %v3221 = vadd.f32 %v3207, %v3220
        %3222 = vdwg.mxu0
        %3223 = vmatpush.bf16.msra.mxu0 %v2146
        %3224 = vmatpush.bf16.msra.mxu0 %v2140
        %3225 = vmatpush.bf16.msra.mxu0 %v2134
        %3226 = vmatpush.bf16.msra.mxu0 %v2128
        %3227 = vmatpush.bf16.msra.mxu0 %v2122
        %3228 = vmatpush.bf16.msra.mxu0 %v2116
        %3229 = vmatpush.bf16.msra.mxu0 %v2110
        %3230 = vmatpush.bf16.msra.mxu0 %v2104
        %3231 = vmatmul.bf16.gmra.mxu0 %v649
        %v3232 = vpop.f32.mrf.mxu0
        %v3233 = vadd.f32 %v3219, %v3232
        %v3234 = vpop.f32.mrf.mxu0
        %v3235 = vadd.f32 %v3221, %v3234
        %3236 = vdwg.mxu0
        %3237 = vmatpush.bf16.msra.mxu0 %v2194
        %3238 = vmatpush.bf16.msra.mxu0 %v2188
        %3239 = vmatpush.bf16.msra.mxu0 %v2182
        %3240 = vmatpush.bf16.msra.mxu0 %v2176
        %3241 = vmatpush.bf16.msra.mxu0 %v2170
        %3242 = vmatpush.bf16.msra.mxu0 %v2164
        %3243 = vmatpush.bf16.msra.mxu0 %v2158
        %3244 = vmatpush.bf16.msra.mxu0 %v2152
        %3245 = vmatmul.bf16.gmra.mxu0 %v650
        %v3246 = vpop.f32.mrf.mxu0
        %v3247 = vadd.f32 %v3233, %v3246
        %v3248 = vpop.f32.mrf.mxu0
        %v3249 = vadd.f32 %v3235, %v3248
        %3250 = vdwg.mxu0
        %v3251 = vmul.f32 %v2687, %v2687
        %v3252 = vmul.f32 %v2799, %v2799
        %v3253 = vmul.f32 %v2911, %v2911
        %v3254 = vmul.f32 %v2689, %v2689
        %v3255 = vmul.f32 %v2801, %v2801
        %v3256 = vmul.f32 %v2913, %v2913
        %v3257 = vmul.f32 %v3023, %v3023
        %v3258 = vmul.f32 %v3135, %v3135
        %v3259 = vmul.f32 %v3247, %v3247
        %v3260 = vmul.f32 %v3025, %v3025
        %v3261 = vmul.f32 %v3137, %v3137
        %v3262 = vmul.f32 %v3249, %v3249
        %v3263 = vadd.f32 %v3251, %v3257
        %v3264 = vadd.f32 %v3252, %v3258
        %v3265 = vadd.f32 %v3253, %v3259
        %v3266 = vadd.f32 %v3254, %v3260
        %v3267 = vadd.f32 %v3255, %v3261
        %v3268 = vadd.f32 %v3256, %v3262
        %v3269 = vrsqrt.pop %v3263
        %v3270 = vmul.f32 %v3269, %v3263
        %v3271 = vmul.f32 %v3270, %v3269
        %v3272 = vmul.f32 0.5, %v3271
        %v3273 = vsub.f32 1.5, %v3272
        %v3274 = vmul.f32 %v3269, %v3273
        %v3275 = vmul.f32 %v3263, %v3274
        %vm3276 = vcmp.eq.f32.partialorder %v3263, inf
        %v3277 = vsel %vm3276, %v3263, %v3275
        %vm3278 = vcmp.eq.f32.partialorder %v3263, 0.0
        %v3279 = vand.u32 %v3263, 2147483648
        %v3280 = vsel %vm3278, %v3279, %v3277
        %v3281 = vrsqrt.pop %v3264
        %v3282 = vmul.f32 %v3281, %v3264
        %v3283 = vmul.f32 %v3282, %v3281
        %v3284 = vmul.f32 0.5, %v3283
        %v3285 = vsub.f32 1.5, %v3284
        %v3286 = vmul.f32 %v3281, %v3285
        %v3287 = vmul.f32 %v3264, %v3286
        %vm3288 = vcmp.eq.f32.partialorder %v3264, inf
        %v3289 = vsel %vm3288, %v3264, %v3287
        %vm3290 = vcmp.eq.f32.partialorder %v3264, 0.0
        %v3291 = vand.u32 %v3264, 2147483648
        %v3292 = vsel %vm3290, %v3291, %v3289
        %v3293 = vrsqrt.pop %v3265
        %v3294 = vmul.f32 %v3293, %v3265
        %v3295 = vmul.f32 %v3294, %v3293
        %v3296 = vmul.f32 0.5, %v3295
        %v3297 = vsub.f32 1.5, %v3296
        %v3298 = vmul.f32 %v3293, %v3297
        %v3299 = vmul.f32 %v3265, %v3298
        %vm3300 = vcmp.eq.f32.partialorder %v3265, inf
        %v3301 = vsel %vm3300, %v3265, %v3299
        %vm3302 = vcmp.eq.f32.partialorder %v3265, 0.0
        %v3303 = vand.u32 %v3265, 2147483648
        %v3304 = vsel %vm3302, %v3303, %v3301
        %v3305 = vrsqrt.pop %v3266
        %v3306 = vmul.f32 %v3305, %v3266
        %v3307 = vmul.f32 %v3306, %v3305
        %v3308 = vmul.f32 0.5, %v3307
        %v3309 = vsub.f32 1.5, %v3308
        %v3310 = vmul.f32 %v3305, %v3309
        %v3311 = vmul.f32 %v3266, %v3310
        %vm3312 = vcmp.eq.f32.partialorder %v3266, inf
        %v3313 = vsel %vm3312, %v3266, %v3311
        %vm3314 = vcmp.eq.f32.partialorder %v3266, 0.0
        %v3315 = vand.u32 %v3266, 2147483648
        %v3316 = vsel %vm3314, %v3315, %v3313
        %v3317 = vrsqrt.pop %v3267
        %v3318 = vmul.f32 %v3317, %v3267
        %v3319 = vmul.f32 %v3318, %v3317
        %v3320 = vmul.f32 0.5, %v3319
        %v3321 = vsub.f32 1.5, %v3320
        %v3322 = vmul.f32 %v3317, %v3321
        %v3323 = vmul.f32 %v3267, %v3322
        %vm3324 = vcmp.eq.f32.partialorder %v3267, inf
        %v3325 = vsel %vm3324, %v3267, %v3323
        %vm3326 = vcmp.eq.f32.partialorder %v3267, 0.0
        %v3327 = vand.u32 %v3267, 2147483648
        %v3328 = vsel %vm3326, %v3327, %v3325
        %v3329 = vrsqrt.pop %v3268
        %v3330 = vmul.f32 %v3329, %v3268
        %v3331 = vmul.f32 %v3330, %v3329
        %v3332 = vmul.f32 0.5, %v3331
        %v3333 = vsub.f32 1.5, %v3332
        %v3334 = vmul.f32 %v3329, %v3333
        %v3335 = vmul.f32 %v3268, %v3334
        %vm3336 = vcmp.eq.f32.partialorder %v3268, inf
        %v3337 = vsel %vm3336, %v3268, %v3335
        %vm3338 = vcmp.eq.f32.partialorder %v3268, 0.0
        %v3339 = vand.u32 %v3268, 2147483648
        %v3340 = vsel %vm3338, %v3339, %v3337
        %v3341 = vpack.c.bf16 %v3316, %v3280
        %v3342 = vpack.c.bf16 %v3328, %v3292
        %v3343 = vpack.c.bf16 %v3340, %v3304
        %v3344 = vld [vmem:[#allocation7] sm:$0xf]
        %v3345 = vld [vmem:[#allocation7 + $0x4] sm:$0xf]
        %v3346 = vld [vmem:[#allocation7 + $0x8] sm:$0xf]
        %v3347 = vld [vmem:[#allocation7 + $0xc] sm:$0xf]
        %v3348 = vld [vmem:[#allocation7 + $0x10] sm:$0xf]
        %v3349 = vld [vmem:[#allocation7 + $0x14] sm:$0xf]
        %v3350 = vld [vmem:[#allocation7 + $0x18] sm:$0xf]
        %v3351 = vld [vmem:[#allocation7 + $0x1c] sm:$0xf]
        %v3352 = vld [vmem:[#allocation7 + $0x20] sm:$0xf]
        %v3353 = vld [vmem:[#allocation7 + $0x24] sm:$0xf]
        %v3354 = vld [vmem:[#allocation7 + $0x28] sm:$0xf]
        %v3355 = vld [vmem:[#allocation7 + $0x2c] sm:$0xf]
        %v3356 = vld [vmem:[#allocation7 + $0x30] sm:$0xf]
        %v3357 = vld [vmem:[#allocation7 + $0x34] sm:$0xf]
        %v3358 = vld [vmem:[#allocation7 + $0x38] sm:$0xf]
        %v3359 = vld [vmem:[#allocation7 + $0x3c] sm:$0xf]
        %v3360 = vld [vmem:[#allocation7 + $0x40] sm:$0xf]
        %v3361 = vld [vmem:[#allocation7 + $0x44] sm:$0xf]
        %v3362 = vld [vmem:[#allocation7 + $0x48] sm:$0xf]
        %v3363 = vld [vmem:[#allocation7 + $0x4c] sm:$0xf]
        %v3364 = vld [vmem:[#allocation7 + $0x50] sm:$0xf]
        %v3365 = vld [vmem:[#allocation7 + $0x54] sm:$0xf]
        %v3366 = vld [vmem:[#allocation7 + $0x58] sm:$0xf]
        %v3367 = vld [vmem:[#allocation7 + $0x5c] sm:$0xf]
        %v3368 = vld [vmem:[#allocation7 + $0x60] sm:$0xf]
        %v3369 = vld [vmem:[#allocation7 + $0x64] sm:$0xf]
        %v3370 = vld [vmem:[#allocation7 + $0x68] sm:$0xf]
        %v3371 = vld [vmem:[#allocation7 + $0x6c] sm:$0xf]
        %v3372 = vld [vmem:[#allocation7 + $0x70] sm:$0xf]
        %v3373 = vld [vmem:[#allocation7 + $0x74] sm:$0xf]
        %v3374 = vld [vmem:[#allocation7 + $0x78] sm:$0xf]
        %v3375 = vld [vmem:[#allocation7 + $0x7c] sm:$0xf]
        %v3376 = vld [vmem:[#allocation7 + $0x80] sm:$0xf]
        %v3377 = vld [vmem:[#allocation7 + $0x84] sm:$0xf]
        %v3378 = vld [vmem:[#allocation7 + $0x88] sm:$0xf]
        %v3379 = vld [vmem:[#allocation7 + $0x8c] sm:$0xf]
        %v3380 = vld [vmem:[#allocation7 + $0x90] sm:$0xf]
        %v3381 = vld [vmem:[#allocation7 + $0x94] sm:$0xf]
        %v3382 = vld [vmem:[#allocation7 + $0x98] sm:$0xf]
        %v3383 = vld [vmem:[#allocation7 + $0x9c] sm:$0xf]
        %v3384 = vld [vmem:[#allocation7 + $0xa0] sm:$0xf]
        %v3385 = vld [vmem:[#allocation7 + $0xa4] sm:$0xf]
        %v3386 = vld [vmem:[#allocation7 + $0xa8] sm:$0xf]
        %v3387 = vld [vmem:[#allocation7 + $0xac] sm:$0xf]
        %v3388 = vld [vmem:[#allocation7 + $0xb0] sm:$0xf]
        %v3389 = vld [vmem:[#allocation7 + $0xb4] sm:$0xf]
        %v3390 = vld [vmem:[#allocation7 + $0xb8] sm:$0xf]
        %v3391 = vld [vmem:[#allocation7 + $0xbc] sm:$0xf]
        %v3440 = vunpack.c.l.b16 %v3344
        %v3441 = vunpack.c.l.b16 %v3345
        %v3442 = vunpack.c.l.b16 %v3346
        %v3443 = vunpack.c.l.b16 %v3347
        %v3444 = vunpack.c.l.b16 %v3348
        %v3445 = vunpack.c.l.b16 %v3349
        %v3446 = vunpack.c.l.b16 %v3350
        %v3447 = vunpack.c.l.b16 %v3351
        %v3448 = vunpack.c.l.b16 %v3352
        %v3449 = vunpack.c.l.b16 %v3353
        %v3450 = vunpack.c.l.b16 %v3354
        %v3451 = vunpack.c.l.b16 %v3355
        %v3452 = vunpack.c.l.b16 %v3356
        %v3453 = vunpack.c.l.b16 %v3357
        %v3454 = vunpack.c.l.b16 %v3358
        %v3455 = vunpack.c.l.b16 %v3359
        %v3456 = vunpack.c.l.b16 %v3360
        %v3457 = vunpack.c.l.b16 %v3361
        %v3458 = vunpack.c.l.b16 %v3362
        %v3459 = vunpack.c.l.b16 %v3363
        %v3460 = vunpack.c.l.b16 %v3364
        %v3461 = vunpack.c.l.b16 %v3365
        %v3462 = vunpack.c.l.b16 %v3366
        %v3463 = vunpack.c.l.b16 %v3367
        %v3464 = vunpack.c.l.b16 %v3368
        %v3465 = vunpack.c.l.b16 %v3369
        %v3466 = vunpack.c.l.b16 %v3370
        %v3467 = vunpack.c.l.b16 %v3371
        %v3468 = vunpack.c.l.b16 %v3372
        %v3469 = vunpack.c.l.b16 %v3373
        %v3470 = vunpack.c.l.b16 %v3374
        %v3471 = vunpack.c.l.b16 %v3375
        %v3472 = vunpack.c.l.b16 %v3376
        %v3473 = vunpack.c.l.b16 %v3377
        %v3474 = vunpack.c.l.b16 %v3378
        %v3475 = vunpack.c.l.b16 %v3379
        %v3476 = vunpack.c.l.b16 %v3380
        %v3477 = vunpack.c.l.b16 %v3381
        %v3478 = vunpack.c.l.b16 %v3382
        %v3479 = vunpack.c.l.b16 %v3383
        %v3480 = vunpack.c.l.b16 %v3384
        %v3481 = vunpack.c.l.b16 %v3385
        %v3482 = vunpack.c.l.b16 %v3386
        %v3483 = vunpack.c.l.b16 %v3387
        %v3484 = vunpack.c.l.b16 %v3388
        %v3485 = vunpack.c.l.b16 %v3389
        %v3486 = vunpack.c.l.b16 %v3390
        %v3487 = vunpack.c.l.b16 %v3391
        %v3488 = vpack.c.b16 %v3441, %v3440
        %v3489 = vpack.c.b16 %v3443, %v3442
        %v3490 = vpack.c.b16 %v3445, %v3444
        %v3491 = vpack.c.b16 %v3447, %v3446
        %v3492 = vpack.c.b16 %v3449, %v3448
        %v3493 = vpack.c.b16 %v3451, %v3450
        %v3494 = vpack.c.b16 %v3453, %v3452
        %v3495 = vpack.c.b16 %v3455, %v3454
        %v3496 = vpack.c.b16 %v3457, %v3456
        %v3497 = vpack.c.b16 %v3459, %v3458
        %v3498 = vpack.c.b16 %v3461, %v3460
        %v3499 = vpack.c.b16 %v3463, %v3462
        %v3500 = vpack.c.b16 %v3465, %v3464
        %v3501 = vpack.c.b16 %v3467, %v3466
        %v3502 = vpack.c.b16 %v3469, %v3468
        %v3503 = vpack.c.b16 %v3471, %v3470
        %v3504 = vpack.c.b16 %v3473, %v3472
        %v3505 = vpack.c.b16 %v3475, %v3474
        %v3506 = vpack.c.b16 %v3477, %v3476
        %v3507 = vpack.c.b16 %v3479, %v3478
        %v3508 = vpack.c.b16 %v3481, %v3480
        %v3509 = vpack.c.b16 %v3483, %v3482
        %v3510 = vpack.c.b16 %v3485, %v3484
        %v3511 = vpack.c.b16 %v3487, %v3486
        %3536 = vmatpush.bf16.msra.mxu0 %v3495
        %3537 = vmatpush.bf16.msra.mxu0 %v3494
        %3538 = vmatpush.bf16.msra.mxu0 %v3493
        %3539 = vmatpush.bf16.msra.mxu0 %v3492
        %3540 = vmatpush.bf16.msra.mxu0 %v3491
        %3541 = vmatpush.bf16.msra.mxu0 %v3490
        %3542 = vmatpush.bf16.msra.mxu0 %v3489
        %3543 = vmatpush.bf16.msra.mxu0 %v3488
        %3544 = vmatmul.bf16.gmra.mxu0 %v3341
        %v3545 = vpop.f32.mrf.mxu0
        %v3546 = vadd.f32 0.0, %v3545
        %v3547 = vpop.f32.mrf.mxu0
        %v3548 = vadd.f32 0.0, %v3547
        %3549 = vdwg.mxu0
        %3550 = vmatpush.bf16.msra.mxu0 %v3503
        %3551 = vmatpush.bf16.msra.mxu0 %v3502
        %3552 = vmatpush.bf16.msra.mxu0 %v3501
        %3553 = vmatpush.bf16.msra.mxu0 %v3500
        %3554 = vmatpush.bf16.msra.mxu0 %v3499
        %3555 = vmatpush.bf16.msra.mxu0 %v3498
        %3556 = vmatpush.bf16.msra.mxu0 %v3497
        %3557 = vmatpush.bf16.msra.mxu0 %v3496
        %3558 = vmatmul.bf16.gmra.mxu0 %v3342
        %v3559 = vpop.f32.mrf.mxu0
        %v3560 = vadd.f32 %v3546, %v3559
        %v3561 = vpop.f32.mrf.mxu0
        %v3562 = vadd.f32 %v3548, %v3561
        %3563 = vdwg.mxu0
        %3564 = vmatpush.bf16.msra.mxu0 %v3511
        %3565 = vmatpush.bf16.msra.mxu0 %v3510
        %3566 = vmatpush.bf16.msra.mxu0 %v3509
        %3567 = vmatpush.bf16.msra.mxu0 %v3508
        %3568 = vmatpush.bf16.msra.mxu0 %v3507
        %3569 = vmatpush.bf16.msra.mxu0 %v3506
        %3570 = vmatpush.bf16.msra.mxu0 %v3505
        %3571 = vmatpush.bf16.msra.mxu0 %v3504
        %3572 = vmatmul.bf16.gmra.mxu0 %v3343
        %v3573 = vpop.f32.mrf.mxu0
        %v3574 = vadd.f32 %v3560, %v3573
        %v3575 = vpop.f32.mrf.mxu0
        %v3576 = vadd.f32 %v3562, %v3575
        %3577 = vdwg.mxu0
        %v3578 = vmax.f32 %v3574, 1e-05
        %v3579 = vmax.f32 %v3576, 1e-05
        %v3580 = vlog2.pop %v3578
        %v3581 = vmul.f32 %v3580, 0.6931472
        %v3582 = vlog2.pop %v3579
        %v3583 = vmul.f32 %v3582, 0.6931472
        %3584 = vst [vmem:[%s224] sm:$0xff] %v3581
        %3585 = vst [vmem:[%s224 + $0x8] sm:$0xff] %v3583
        %s3586 = sand.u32 %s97, 1
        %s3587 = scalar_lea.sflag [#allocation4], %s3586
        %s3588 = sand.u32 %s97, 1
        %s3589 = smul.addr %s3588, 16
        %s3590 = scalar_lea.vmem [#allocation8], %s3589
        // Predicated region
        $region45: #{tpu_custom_call.1} parent=31 // pred_check
          %p3591 = pneg %p107
        $region46: #{tpu_custom_call.1} parent=31 // pred_check_branch
          %3593 = sbr.rel (%p3591) target = $region48
        $region47: #{tpu_custom_call.1} parent=31 // pred_region
          %s3594 = smul.u32 2, %s21
          %3596 = vsyncadd %s3587, 0
          %s3597 = smul.addr %s3594, 8
          %s3598 = scalar_lea.hbm %s3, %s3597
          %s3599 = sshll.u32 %s3590, 4
          %s3600 = int_to_ptr.vmem [resolvable:$true] %s3599
          %s3601 = sshll.u32 %s3598, 4
          %s3602 = int_to_ptr.hbm [resolvable:$true] %s3601
          %3607 = dma.vmem_to_hbm [thread:$0]  %s3600, 256, %s3602, %s3587, 128, 128, 8
        $region48: #{tpu_custom_call.1} parent=31 // pred_fallthru
          _
      $region32: #{tpu_custom_call.1} parent=5 // pred_fallthru
        _
      %p3608 = scmp.le.s32.totalorder 2, %s16
      // Predicated region
      $region49: #{tpu_custom_call.1} parent=5 // pred_check
        %p3609 = pneg %p3608
      $region50: #{tpu_custom_call.1} parent=5 // pred_check_branch
        %3611 = sbr.rel (%p3609) target = $region52
      $region51: #{tpu_custom_call.1} parent=5 // pred_region
        %s3612 = ssub.s32 %s16, 2
        // Predicated region
        $region53: #{tpu_custom_call.1} parent=51 // pred_check
          %p3613 = pneg %p113
        $region54: #{tpu_custom_call.1} parent=51 // pred_check_branch
          %3615 = sbr.rel (%p3613) target = $region56
        $region55: #{tpu_custom_call.1} parent=51 // pred_region
          %s3616 = sand.u32 %s98, 1
          %s3617 = scalar_lea.sflag [#allocation4], %s3616
          %s3618 = sand.u32 %s98, 1
          %s3619 = smul.addr %s3618, 16
          %s3620 = scalar_lea.vmem [#allocation8], %s3619
          %3622 = dma.done %s3617, 256
        $region56: #{tpu_custom_call.1} parent=51 // pred_fallthru
          _
      $region52: #{tpu_custom_call.1} parent=5 // pred_fallthru
        _
    $region6: #{tpu_custom_call.1} parent=1 // loop_footer
      %s20 = sadd.s32 1, %s16
    $region7: #{tpu_custom_call.1} parent=1 // loop_footer_branch
      %15 = sbr.rel target = $region3
    $region8: #{tpu_custom_call.1} parent=1 // loop_exit
      _
    %3623 = vsyncpa [#allocation3], 1
    %s3624 = scalar_lea.sflag [#allocation3], 1
    %3625 = vsyncpa %s3624, 1
    %3626 = vsyncpa [#allocation6], 1
    %3627 = vsyncpa [#allocation4], 1
    %s3628 = scalar_lea.sflag [#allocation4], 1
    %3629 = vsyncpa %s3628, 1

</llo_original>
